<compile_context>
chip_gen: v7x
topology: tpu7x:2x2x1
jax: 0.10.0
libtpu: 0.0.40
codegen_flags: <defaults>
</compile_context>

<pallas_src>
import functools

import jax
import jax.numpy as jnp
from jax import lax
from jax.experimental import pallas as pl
from jax.experimental.pallas import tpu as pltpu

F32 = jnp.float32
BF16 = jnp.bfloat16


def _layernorm(x, g, b, eps=1e-5):
    # f32 statistics
    mu = jnp.mean(x, axis=-1, keepdims=True)
    xc = x - mu
    var = jnp.mean(xc * xc, axis=-1, keepdims=True)
    return xc * lax.rsqrt(var + eps) * g + b


def _round_up(x, m):
    return -(-x // m) * m


# ----------------------------------------------------------------------------
# Fused MHABlock kernel: one grid step == one MHA layer, activation stays in VMEM
# ----------------------------------------------------------------------------
def _mha_block_body(q_ref, k_ref, x_ref,
                    wqkv_ref, bqkv_ref, wo_ref, bo_ref,
                    w1_ref, b1_ref, w2_ref, b2_ref,
                    g1_ref, beta1_ref, g2_ref, beta2_ref,
                    out_ref,
                    x_scr,
                    *, num_heads, n_keys, self_attention, non_linearity):
    layer = pl.program_id(0)
    last = pl.num_programs(0) - 1
    e = x_ref.shape[-1]
    hd = e // num_heads
    scale = 1.0 / (float(hd) ** 0.5)
    s_pad = x_ref.shape[0]

    # Running value/activation stream lives in VMEM scratch across all layers.
    @pl.when(layer == 0)
    def _():
        x_scr[...] = x_ref[...]

    wqkv = wqkv_ref[0].astype(BF16)        # (E, 3E) concatenated Q/K/V projection
    bqkv = bqkv_ref[0]                     # (1, 3E) f32

    x = x_scr[...]                         # f32 running activation
    if self_attention:
        qkv = jnp.dot(x.astype(BF16), wqkv, preferred_element_type=F32) + bqkv
        qp, kp, vp = qkv[:, :e], qkv[:, e:2 * e], qkv[:, 2 * e:]
        q_res = x
    else:
        q_in = q_ref[...]
        k_in = k_ref[...]
        qp = jnp.dot(q_in.astype(BF16), wqkv[:, :e],
                     preferred_element_type=F32) + bqkv[:, :e]
        kp = jnp.dot(k_in.astype(BF16), wqkv[:, e:2 * e],
                     preferred_element_type=F32) + bqkv[:, e:2 * e]
        vp = jnp.dot(x.astype(BF16), wqkv[:, 2 * e:],
                     preferred_element_type=F32) + bqkv[:, 2 * e:]
        q_res = q_in

    # Mask padded key columns out of the softmax (f32 bias, static at trace time).
    if n_keys < s_pad:
        kcol = lax.broadcasted_iota(jnp.int32, (1, s_pad), 1)
        key_bias = jnp.where(kcol < n_keys, 0.0, -1e30).astype(F32)
    else:
        key_bias = None

    # Per-head attention: bf16 MXU operands, f32 softmax, accumulate each head
    # directly into the output projection (no lane-concatenate of heads).
    wo = wo_ref[0].astype(BF16)            # (E, E)
    qp_b = qp.astype(BF16)
    kp_b = kp.astype(BF16)
    vp_b = vp.astype(BF16)
    attn_proj = jnp.zeros((s_pad, e), F32)
    for h in range(num_heads):
        sl = slice(h * hd, (h + 1) * hd)
        s = lax.dot_general(qp_b[:, sl], kp_b[:, sl], (((1,), (1,)), ((), ())),
                            preferred_element_type=F32) * scale
        if key_bias is not None:
            s = s + key_bias
        m = jnp.max(s, axis=-1, keepdims=True)
        p = jnp.exp(s - m)
        p = p * pl.reciprocal(jnp.sum(p, axis=-1, keepdims=True), approx=True)
        head = jnp.dot(p.astype(BF16), vp_b[:, sl], preferred_element_type=F32)
        attn_proj = attn_proj + jnp.dot(head.astype(BF16), wo[sl, :],
                                        preferred_element_type=F32)

    # Output projection bias + residual + LN1 (all f32)
    a = attn_proj + bo_ref[0]
    x1 = _layernorm(a + q_res, g1_ref[0], beta1_ref[0])

    # Feed-forward (bf16 operands, f32 accumulate) + residual + LN2
    h1 = jnp.dot(x1.astype(BF16), w1_ref[0].astype(BF16),
                 preferred_element_type=F32) + b1_ref[0]
    if non_linearity == "relu":
        h1 = jnp.maximum(h1, 0.0)
    else:
        h1 = jax.nn.gelu(h1)
    f = jnp.dot(h1.astype(BF16), w2_ref[0].astype(BF16),
                preferred_element_type=F32) + b2_ref[0]
    x2 = _layernorm(x1 + f, g2_ref[0], beta2_ref[0])

    @pl.when(layer < last)
    def _():
        x_scr[...] = x2

    @pl.when(layer == last)
    def _():
        out_ref[...] = x2


def _make_kernel(num_heads, n_keys, self_attention, non_linearity):
    body = functools.partial(_mha_block_body, num_heads=num_heads, n_keys=n_keys,
                             self_attention=self_attention,
                             non_linearity=non_linearity)
    if self_attention:
        # Single activation input (q_ref / k_ref are never read).
        def kernel(x_ref, *rest):
            body(None, None, x_ref, *rest)
        return kernel
    return body


# ----------------------------------------------------------------------------
# Wrapper: padding, BlockSpecs, single pallas_call for the whole block
# ----------------------------------------------------------------------------
def mha_block_forward(params, q, k, v, cfg):
    e = cfg["embed_dim"]
    num_heads = cfg["num_heads"]
    ff = cfg["ff_dim"]
    nl = cfg["num_layers"]
    self_att = cfg["self_attention"]

    n_q, n_kv, n_v = int(q.shape[0]), int(k.shape[0]), int(v.shape[0])
    if self_att:
        n_out, n_keys = n_v, n_v
    else:
        assert n_kv == n_v, "key/value sequence lengths must match"
        n_out, n_keys = n_q, n_kv
        if nl > 1:
            assert n_q == n_kv, "stacked cross-attention layers need #q == #k"

    # Lane-dense (multiple of 128) padding for non-trivial S; sublane (8) else.
    n_max = max(n_q, n_kv, n_v)
    s_pad = _round_up(n_max, 128) if n_max > 16 else max(8, _round_up(n_max, 8))

    def pad_rows(x):
        return jnp.pad(x.astype(F32), ((0, s_pad - x.shape[0]), (0, 0)))

    kernel = _make_kernel(num_heads, n_keys, self_att,
                          cfg.get("non_linearity", "relu"))

    act_spec = pl.BlockSpec((s_pad, e), lambda l: (0, 0))

    def wspec(shape):
        return pl.BlockSpec((1,) + shape, lambda l: (l, 0, 0))

    weight_specs = [wspec((e, 3 * e)), wspec((1, 3 * e)),
                    wspec((e, e)), wspec((1, e)),
                    wspec((e, ff)), wspec((1, ff)),
                    wspec((ff, e)), wspec((1, e)),
                    wspec((1, e)), wspec((1, e)),
                    wspec((1, e)), wspec((1, e))]
    weight_args = (params["wqkv"], params["bqkv"], params["wo"], params["bo"],
                   params["w1"], params["b1"], params["w2"], params["b2"],
                   params["g1"], params["beta1"], params["g2"], params["beta2"])

    if self_att:
        in_specs = [act_spec] + weight_specs
        call_args = (pad_rows(v),) + weight_args
        n_act_inputs = 1
    else:
        in_specs = [act_spec, act_spec, act_spec] + weight_specs
        call_args = (pad_rows(q), pad_rows(k), pad_rows(v)) + weight_args
        n_act_inputs = 3

    # --- VMEM budget for the resident set (double-buffered weights + acts) ---
    w_bytes = (e * 3 * e + e * e + e * ff + ff * e) * 2          # bf16 weights
    b_bytes = (3 * e + e + ff + e + 4 * e) * 4                   # f32 biases/LN
    act_bytes = s_pad * e * 4
    resident = (2 * (w_bytes + b_bytes)                          # double-buffered
                + 2 * n_act_inputs * act_bytes                   # input blocks
                + 2 * act_bytes                                  # output block
                + act_bytes                                      # scratch
                + 4 * s_pad * s_pad * 4)                         # score temporaries
    vmem_limit = int(min(max(resident * 3 // 2 + (4 << 20), 16 << 20), 64 << 20))

    flops_layer = (2 * s_pad * e * 3 * e          # QKV projection
                   + 4 * s_pad * s_pad * e        # attention matmuls
                   + 2 * s_pad * e * e            # output projection
                   + 4 * s_pad * e * ff)          # FF pair
    bytes_params = sum(int(p.size) * p.dtype.itemsize for p in params.values())
    cost = pl.CostEstimate(
        flops=nl * flops_layer,
        transcendentals=nl * (num_heads * s_pad * (s_pad + 1) + 2 * s_pad),
        bytes_accessed=int(bytes_params + (n_act_inputs + 1) * 4 * s_pad * e))

    out = pl.pallas_call(
        kernel,
        out_shape=jax.ShapeDtypeStruct((s_pad, e), F32),
        grid_spec=pltpu.PrefetchScalarGridSpec(
            num_scalar_prefetch=0,
            grid=(nl,),
            in_specs=in_specs,
            out_specs=pl.BlockSpec((s_pad, e), lambda l: (0, 0)),
            scratch_shapes=[pltpu.VMEM((s_pad, e), F32)]),
        compiler_params=pltpu.CompilerParams(
            dimension_semantics=("arbitrary",),
            vmem_limit_bytes=vmem_limit),
        cost_estimate=cost,
    )(*call_args)

    return out[:n_out]


# ----------------------------------------------------------------------------
# Parameter init (stacked along the layer axis, bf16 weights) + JAX reference
# ----------------------------------------------------------------------------
def init_mha_block(key, cfg):
    e, ff, nl = cfg["embed_dim"], cfg["ff_dim"], cfg["num_layers"]
    bias = cfg.get("bias", True)
    ks = jax.random.split(key, 8)

    def u(k, shape, dtype=F32, s=0.1):
        return jax.random.uniform(k, shape, F32, minval=-s, maxval=s).astype(dtype)

    return {
        # MXU-facing weight stacks in bf16 (halves HBM streaming + VMEM).
        "wqkv": u(ks[0], (nl, e, 3 * e), BF16),
        "wo":   u(ks[2], (nl, e, e), BF16),
        "w1":   u(ks[4], (nl, e, ff), BF16),
        "w2":   u(ks[6], (nl, ff, e), BF16),
        # Biases / LN params stay f32 (added / applied in f32).
        "bqkv": u(ks[1], (nl, 1, 3 * e)) if bias else jnp.zeros((nl, 1, 3 * e), F32),
        "bo":   u(ks[3], (nl, 1, e)) if bias else jnp.zeros((nl, 1, e), F32),
        "b1":   u(ks[5], (nl, 1, ff)),
        "b2":   u(ks[7], (nl, 1, e)),
        "g1":   jnp.ones((nl, 1, e), F32), "beta1": jnp.zeros((nl, 1, e), F32),
        "g2":   jnp.ones((nl, 1, e), F32), "beta2": jnp.zeros((nl, 1, e), F32),
    }


def mha_block_reference(params, q, k, v, cfg):
    e, num_heads, nl = cfg["embed_dim"], cfg["num_heads"], cfg["num_layers"]
    hd = e // num_heads
    nonlin = cfg.get("non_linearity", "relu")

    def ln(x, g, b):
        mu = x.mean(-1, keepdims=True)
        var = ((x - mu) ** 2).mean(-1, keepdims=True)
        return (x - mu) / jnp.sqrt(var + 1e-5) * g + b

    x = v
    for l in range(nl):
        if cfg["self_attention"]:
            q_in = k_in = v_in = x
        else:
            q_in, k_in, v_in = q, k, x
        w, b = params["wqkv"][l].astype(F32), params["bqkv"][l]
        qp = q_in @ w[:, :e] + b[:, :e]
        kp = k_in @ w[:, e:2 * e] + b[:, e:2 * e]
        vp = v_in @ w[:, 2 * e:] + b[:, 2 * e:]
        hs = []
        for h in range(num_heads):
            sl = slice(h * hd, (h + 1) * hd)
            s = (qp[:, sl] * (hd ** -0.5)) @ kp[:, sl].T
            hs.append(jax.nn.softmax(s, axis=-1) @ vp[:, sl])
        a = jnp.concatenate(hs, -1) @ params["wo"][l].astype(F32) + params["bo"][l]
        x1 = ln(a + q_in, params["g1"][l], params["beta1"][l])
        h1 = x1 @ params["w1"][l].astype(F32) + params["b1"][l]
        h1 = jnp.maximum(h1, 0.0) if nonlin == "relu" else jax.nn.gelu(h1)
        f = h1 @ params["w2"][l].astype(F32) + params["b2"][l]
        x = ln(x1 + f, params["g2"][l], params["beta2"][l])
    return x


# ----------------------------------------------------------------------------
# Main
# ----------------------------------------------------------------------------
if __name__ == "__main__":
    cfg = dict(embed_dim=32, num_heads=4, ff_dim=64, num_layers=2,
               bias=True, self_attention=True, non_linearity="relu")
    n_tokens = 6
    key = jax.random.PRNGKey(0)
    kq, kk, kv, kp = jax.random.split(key, 4)
    q = jax.random.normal(kq, (n_tokens, cfg["embed_dim"]), F32)
    k = jax.random.normal(kk, (n_tokens, cfg["embed_dim"]), F32)
    v = jax.random.normal(kv, (n_tokens, cfg["embed_dim"]), F32)
    params = init_mha_block(kp, cfg)

    fwd = jax.jit(functools.partial(mha_block_forward, params, cfg=cfg))
    out = jax.block_until_ready(fwd(q, k, v))
    assert out.shape == (n_tokens, cfg["embed_dim"])
    assert bool(jnp.all(jnp.isfinite(out)))

    ref = jax.jit(functools.partial(mha_block_reference, params, cfg=cfg))(q, k, v)
    assert float(jnp.max(jnp.abs(out - ref))) < 5e-2

    # Also exercise the cross-attention (self_attention=False) code path.
    cfg_x = dict(cfg, self_attention=False, num_layers=1)
    params_x = init_mha_block(jax.random.PRNGKey(7), cfg_x)
    fwd_x = jax.jit(functools.partial(mha_block_forward, params_x, cfg=cfg_x))
    out_x = jax.block_until_ready(fwd_x(q, k, v))
    ref_x = jax.jit(functools.partial(mha_block_reference, params_x, cfg=cfg_x))(q, k, v)
    assert out_x.shape == (n_tokens, cfg["embed_dim"])
    assert float(jnp.max(jnp.abs(out_x - ref_x))) < 5e-2

    print("KERNEL_OK")
</pallas_src>

<mosaic_0001>
module attributes {stable_mosaic.version = 11 : i64} {
  func.func @kernel(%arg0: i32, %arg1: memref<8x32xf32, #tpu.memory_space<vmem>>, %arg2: memref<1x32x96xbf16, #tpu.memory_space<vmem>>, %arg3: memref<1x1x96xf32, #tpu.memory_space<vmem>>, %arg4: memref<1x32x32xbf16, #tpu.memory_space<vmem>>, %arg5: memref<1x1x32xf32, #tpu.memory_space<vmem>>, %arg6: memref<1x32x64xbf16, #tpu.memory_space<vmem>>, %arg7: memref<1x1x64xf32, #tpu.memory_space<vmem>>, %arg8: memref<1x64x32xbf16, #tpu.memory_space<vmem>>, %arg9: memref<1x1x32xf32, #tpu.memory_space<vmem>>, %arg10: memref<1x1x32xf32, #tpu.memory_space<vmem>>, %arg11: memref<1x1x32xf32, #tpu.memory_space<vmem>>, %arg12: memref<1x1x32xf32, #tpu.memory_space<vmem>>, %arg13: memref<1x1x32xf32, #tpu.memory_space<vmem>>, %arg14: memref<8x32xf32, #tpu.memory_space<vmem>>, %arg15: memref<8x32xf32, #tpu.memory_space<vmem>>) attributes {dimension_semantics = [#tpu.dimension_semantics<arbitrary>], iteration_bounds = array<i64: 2>, scalar_prefetch = 0 : i64, scratch_operands = 1 : i64, tpu.core_type = #tpu.core_type<tc>, window_params = [{pipeline_mode = #tpu.pipeline_mode<synchronous>, transform_indices = @transform_0, window_bounds = array<i64: 8, 32>}, {transform_indices = @transform_1, window_bounds = array<i64: 1, 32, 96>}, {transform_indices = @transform_2, window_bounds = array<i64: 1, 1, 96>}, {transform_indices = @transform_3, window_bounds = array<i64: 1, 32, 32>}, {transform_indices = @transform_4, window_bounds = array<i64: 1, 1, 32>}, {transform_indices = @transform_5, window_bounds = array<i64: 1, 32, 64>}, {transform_indices = @transform_6, window_bounds = array<i64: 1, 1, 64>}, {transform_indices = @transform_7, window_bounds = array<i64: 1, 64, 32>}, {transform_indices = @transform_8, window_bounds = array<i64: 1, 1, 32>}, {transform_indices = @transform_9, window_bounds = array<i64: 1, 1, 32>}, {transform_indices = @transform_10, window_bounds = array<i64: 1, 1, 32>}, {transform_indices = @transform_11, window_bounds = array<i64: 1, 1, 32>}, {transform_indices = @transform_12, window_bounds = array<i64: 1, 1, 32>}, {pipeline_mode = #tpu.pipeline_mode<synchronous>, transform_indices = @transform_13, window_bounds = array<i64: 8, 32>}]} {
    %c0_i32 = arith.constant 0 : i32
    %0 = arith.cmpi eq, %arg0, %c0_i32 : i32
    %1 = arith.extui %0 : i1 to i32
    %c0_i32_0 = arith.constant 0 : i32
    %2 = arith.cmpi ne, %1, %c0_i32_0 : i32
    scf.if %2 {
      %c0_81 = arith.constant 0 : index
      %c0_82 = arith.constant 0 : index
      %201 = vector.load %arg1[%c0_81, %c0_82] : memref<8x32xf32, #tpu.memory_space<vmem>>, vector<8x32xf32>
      %c0_83 = arith.constant 0 : index
      %c0_84 = arith.constant 0 : index
      %202 = vector.load %arg15[%c0_83, %c0_84] : memref<8x32xf32, #tpu.memory_space<vmem>>, vector<8x32xf32>
      tpu.vector_store %arg15[%c0_83, %c0_84], %201 {strides = array<i32>} : memref<8x32xf32, #tpu.memory_space<vmem>>, vector<8x32xf32>,
    } else {
    }
    %c0 = arith.constant 0 : index
    %c0_1 = arith.constant 0 : index
    %c0_2 = arith.constant 0 : index
    %3 = vector.load %arg2[%c0, %c0_1, %c0_2] : memref<1x32x96xbf16, #tpu.memory_space<vmem>>, vector<1x32x96xbf16>
    %4 = vector.shape_cast %3 : vector<1x32x96xbf16> to vector<32x96xbf16>
    %c0_3 = arith.constant 0 : index
    %c0_4 = arith.constant 0 : index
    %c0_5 = arith.constant 0 : index
    %5 = vector.load %arg3[%c0_3, %c0_4, %c0_5] : memref<1x1x96xf32, #tpu.memory_space<vmem>>, vector<1x1x96xf32>
    %6 = vector.shape_cast %5 : vector<1x1x96xf32> to vector<1x96xf32>
    %c0_6 = arith.constant 0 : index
    %c0_7 = arith.constant 0 : index
    %7 = vector.load %arg15[%c0_6, %c0_7] : memref<8x32xf32, #tpu.memory_space<vmem>>, vector<8x32xf32>
    %8 = arith.truncf %7 : vector<8x32xf32> to vector<8x32xbf16>
    %cst = arith.constant dense<0.000000e+00> : vector<8x96xf32>
    %9 = tpu.matmul %8, %4, %cst {dimension_numbers = #tpu.dot_dimension_numbers<[1], [0], [0], [1], [0, 0, 1, 1], [], []>} : vector<8x32xbf16>, vector<32x96xbf16>, vector<8x96xf32> -> vector<8x96xf32>
    %10 = vector.broadcast %6 : vector<1x96xf32> to vector<8x96xf32>
    %11 = arith.addf %9, %10 : vector<8x96xf32>
    %12 = vector.extract_strided_slice %11 {offsets = [0, 0], sizes = [8, 32], strides = [1, 1]} : vector<8x96xf32> to vector<8x32xf32>
    %13 = vector.extract_strided_slice %11 {offsets = [0, 32], sizes = [8, 32], strides = [1, 1]} : vector<8x96xf32> to vector<8x32xf32>
    %14 = vector.extract_strided_slice %11 {offsets = [0, 64], sizes = [8, 32], strides = [1, 1]} : vector<8x96xf32> to vector<8x32xf32>
    %15 = tpu.iota {dimensions = array<i32: 1>} : vector<1x8xi32>
    %c6_i32 = arith.constant 6 : i32
    %16 = vector.broadcast %c6_i32 : i32 to vector<1x8xi32>
    %17 = arith.cmpi slt, %15, %16 : vector<1x8xi32>
    %cst_8 = arith.constant 0.000000e+00 : f32
    %cst_9 = arith.constant -1.000000e+30 : f32
    %18 = vector.broadcast %cst_8 : f32 to vector<1x8xf32>
    %19 = vector.broadcast %cst_9 : f32 to vector<1x8xf32>
    %20 = arith.select %17, %18, %19 : vector<1x8xi1>, vector<1x8xf32>
    %c0_10 = arith.constant 0 : index
    %c0_11 = arith.constant 0 : index
    %c0_12 = arith.constant 0 : index
    %21 = vector.load %arg4[%c0_10, %c0_11, %c0_12] : memref<1x32x32xbf16, #tpu.memory_space<vmem>>, vector<1x32x32xbf16>
    %22 = vector.shape_cast %21 : vector<1x32x32xbf16> to vector<32x32xbf16>
    %23 = arith.truncf %12 : vector<8x32xf32> to vector<8x32xbf16>
    %24 = arith.truncf %13 : vector<8x32xf32> to vector<8x32xbf16>
    %25 = arith.truncf %14 : vector<8x32xf32> to vector<8x32xbf16>
    %cst_13 = arith.constant 0.000000e+00 : f32
    %26 = vector.broadcast %cst_13 : f32 to vector<8x32xf32>
    %27 = vector.extract_strided_slice %23 {offsets = [0, 0], sizes = [8, 8], strides = [1, 1]} : vector<8x32xbf16> to vector<8x8xbf16>
    %28 = vector.extract_strided_slice %24 {offsets = [0, 0], sizes = [8, 8], strides = [1, 1]} : vector<8x32xbf16> to vector<8x8xbf16>
    %cst_14 = arith.constant dense<0.000000e+00> : vector<8x8xf32>
    %29 = tpu.matmul %27, %28, %cst_14 {dimension_numbers = #tpu.dot_dimension_numbers<[1], [1], [0], [0], [0, 0, 1, 0], [], []>} : vector<8x8xbf16>, vector<8x8xbf16>, vector<8x8xf32> -> vector<8x8xf32>
    %cst_15 = arith.constant 0.353553385 : f32
    %30 = vector.broadcast %cst_15 : f32 to vector<8x8xf32>
    %31 = arith.mulf %29, %30 : vector<8x8xf32>
    %32 = vector.broadcast %20 : vector<1x8xf32> to vector<8x8xf32>
    %33 = arith.addf %31, %32 : vector<8x8xf32>
    %cst_16 = arith.constant dense<0xFF800000> : vector<8xf32>
    %34 = vector.multi_reduction <maximumf>, %33, %cst_16 [1] : vector<8x8xf32> to vector<8xf32>
    %35 = vector.shape_cast %34 : vector<8xf32> to vector<8x1xf32>
    %36 = vector.broadcast %35 : vector<8x1xf32> to vector<8x8xf32>
    %37 = arith.subf %33, %36 : vector<8x8xf32>
    %38 = math.exp %37 : vector<8x8xf32>
    %cst_17 = arith.constant dense<0.000000e+00> : vector<8xf32>
    %39 = vector.multi_reduction <add>, %38, %cst_17 [1] : vector<8x8xf32> to vector<8xf32>
    %40 = vector.shape_cast %39 : vector<8xf32> to vector<8x1xf32>
    %41 = tpu.reciprocal %40 {approx = true} : vector<8x1xf32> -> vector<8x1xf32>
    %42 = vector.broadcast %41 : vector<8x1xf32> to vector<8x8xf32>
    %43 = arith.mulf %38, %42 : vector<8x8xf32>
    %44 = arith.truncf %43 : vector<8x8xf32> to vector<8x8xbf16>
    %45 = vector.extract_strided_slice %25 {offsets = [0, 0], sizes = [8, 8], strides = [1, 1]} : vector<8x32xbf16> to vector<8x8xbf16>
    %cst_18 = arith.constant dense<0.000000e+00> : vector<8x8xf32>
    %46 = tpu.matmul %44, %45, %cst_18 {dimension_numbers = #tpu.dot_dimension_numbers<[1], [0], [0], [1], [0, 0, 1, 1], [], []>} : vector<8x8xbf16>, vector<8x8xbf16>, vector<8x8xf32> -> vector<8x8xf32>
    %47 = arith.truncf %46 : vector<8x8xf32> to vector<8x8xbf16>
    %48 = vector.extract_strided_slice %22 {offsets = [0, 0], sizes = [8, 32], strides = [1, 1]} : vector<32x32xbf16> to vector<8x32xbf16>
    %cst_19 = arith.constant dense<0.000000e+00> : vector<8x32xf32>
    %49 = tpu.matmul %47, %48, %cst_19 {dimension_numbers = #tpu.dot_dimension_numbers<[1], [0], [0], [1], [0, 0, 1, 1], [], []>} : vector<8x8xbf16>, vector<8x32xbf16>, vector<8x32xf32> -> vector<8x32xf32>
    %50 = arith.addf %26, %49 : vector<8x32xf32>
    %51 = vector.extract_strided_slice %23 {offsets = [0, 8], sizes = [8, 8], strides = [1, 1]} : vector<8x32xbf16> to vector<8x8xbf16>
    %52 = vector.extract_strided_slice %24 {offsets = [0, 8], sizes = [8, 8], strides = [1, 1]} : vector<8x32xbf16> to vector<8x8xbf16>
    %cst_20 = arith.constant dense<0.000000e+00> : vector<8x8xf32>
    %53 = tpu.matmul %51, %52, %cst_20 {dimension_numbers = #tpu.dot_dimension_numbers<[1], [1], [0], [0], [0, 0, 1, 0], [], []>} : vector<8x8xbf16>, vector<8x8xbf16>, vector<8x8xf32> -> vector<8x8xf32>
    %cst_21 = arith.constant 0.353553385 : f32
    %54 = vector.broadcast %cst_21 : f32 to vector<8x8xf32>
    %55 = arith.mulf %53, %54 : vector<8x8xf32>
    %56 = vector.broadcast %20 : vector<1x8xf32> to vector<8x8xf32>
    %57 = arith.addf %55, %56 : vector<8x8xf32>
    %cst_22 = arith.constant dense<0xFF800000> : vector<8xf32>
    %58 = vector.multi_reduction <maximumf>, %57, %cst_22 [1] : vector<8x8xf32> to vector<8xf32>
    %59 = vector.shape_cast %58 : vector<8xf32> to vector<8x1xf32>
    %60 = vector.broadcast %59 : vector<8x1xf32> to vector<8x8xf32>
    %61 = arith.subf %57, %60 : vector<8x8xf32>
    %62 = math.exp %61 : vector<8x8xf32>
    %cst_23 = arith.constant dense<0.000000e+00> : vector<8xf32>
    %63 = vector.multi_reduction <add>, %62, %cst_23 [1] : vector<8x8xf32> to vector<8xf32>
    %64 = vector.shape_cast %63 : vector<8xf32> to vector<8x1xf32>
    %65 = tpu.reciprocal %64 {approx = true} : vector<8x1xf32> -> vector<8x1xf32>
    %66 = vector.broadcast %65 : vector<8x1xf32> to vector<8x8xf32>
    %67 = arith.mulf %62, %66 : vector<8x8xf32>
    %68 = arith.truncf %67 : vector<8x8xf32> to vector<8x8xbf16>
    %69 = vector.extract_strided_slice %25 {offsets = [0, 8], sizes = [8, 8], strides = [1, 1]} : vector<8x32xbf16> to vector<8x8xbf16>
    %cst_24 = arith.constant dense<0.000000e+00> : vector<8x8xf32>
    %70 = tpu.matmul %68, %69, %cst_24 {dimension_numbers = #tpu.dot_dimension_numbers<[1], [0], [0], [1], [0, 0, 1, 1], [], []>} : vector<8x8xbf16>, vector<8x8xbf16>, vector<8x8xf32> -> vector<8x8xf32>
    %71 = arith.truncf %70 : vector<8x8xf32> to vector<8x8xbf16>
    %72 = vector.extract_strided_slice %22 {offsets = [8, 0], sizes = [8, 32], strides = [1, 1]} : vector<32x32xbf16> to vector<8x32xbf16>
    %cst_25 = arith.constant dense<0.000000e+00> : vector<8x32xf32>
    %73 = tpu.matmul %71, %72, %cst_25 {dimension_numbers = #tpu.dot_dimension_numbers<[1], [0], [0], [1], [0, 0, 1, 1], [], []>} : vector<8x8xbf16>, vector<8x32xbf16>, vector<8x32xf32> -> vector<8x32xf32>
    %74 = arith.addf %50, %73 : vector<8x32xf32>
    %75 = vector.extract_strided_slice %23 {offsets = [0, 16], sizes = [8, 8], strides = [1, 1]} : vector<8x32xbf16> to vector<8x8xbf16>
    %76 = vector.extract_strided_slice %24 {offsets = [0, 16], sizes = [8, 8], strides = [1, 1]} : vector<8x32xbf16> to vector<8x8xbf16>
    %cst_26 = arith.constant dense<0.000000e+00> : vector<8x8xf32>
    %77 = tpu.matmul %75, %76, %cst_26 {dimension_numbers = #tpu.dot_dimension_numbers<[1], [1], [0], [0], [0, 0, 1, 0], [], []>} : vector<8x8xbf16>, vector<8x8xbf16>, vector<8x8xf32> -> vector<8x8xf32>
    %cst_27 = arith.constant 0.353553385 : f32
    %78 = vector.broadcast %cst_27 : f32 to vector<8x8xf32>
    %79 = arith.mulf %77, %78 : vector<8x8xf32>
    %80 = vector.broadcast %20 : vector<1x8xf32> to vector<8x8xf32>
    %81 = arith.addf %79, %80 : vector<8x8xf32>
    %cst_28 = arith.constant dense<0xFF800000> : vector<8xf32>
    %82 = vector.multi_reduction <maximumf>, %81, %cst_28 [1] : vector<8x8xf32> to vector<8xf32>
    %83 = vector.shape_cast %82 : vector<8xf32> to vector<8x1xf32>
    %84 = vector.broadcast %83 : vector<8x1xf32> to vector<8x8xf32>
    %85 = arith.subf %81, %84 : vector<8x8xf32>
    %86 = math.exp %85 : vector<8x8xf32>
    %cst_29 = arith.constant dense<0.000000e+00> : vector<8xf32>
    %87 = vector.multi_reduction <add>, %86, %cst_29 [1] : vector<8x8xf32> to vector<8xf32>
    %88 = vector.shape_cast %87 : vector<8xf32> to vector<8x1xf32>
    %89 = tpu.reciprocal %88 {approx = true} : vector<8x1xf32> -> vector<8x1xf32>
    %90 = vector.broadcast %89 : vector<8x1xf32> to vector<8x8xf32>
    %91 = arith.mulf %86, %90 : vector<8x8xf32>
    %92 = arith.truncf %91 : vector<8x8xf32> to vector<8x8xbf16>
    %93 = vector.extract_strided_slice %25 {offsets = [0, 16], sizes = [8, 8], strides = [1, 1]} : vector<8x32xbf16> to vector<8x8xbf16>
    %cst_30 = arith.constant dense<0.000000e+00> : vector<8x8xf32>
    %94 = tpu.matmul %92, %93, %cst_30 {dimension_numbers = #tpu.dot_dimension_numbers<[1], [0], [0], [1], [0, 0, 1, 1], [], []>} : vector<8x8xbf16>, vector<8x8xbf16>, vector<8x8xf32> -> vector<8x8xf32>
    %95 = arith.truncf %94 : vector<8x8xf32> to vector<8x8xbf16>
    %96 = vector.extract_strided_slice %22 {offsets = [16, 0], sizes = [8, 32], strides = [1, 1]} : vector<32x32xbf16> to vector<8x32xbf16>
    %cst_31 = arith.constant dense<0.000000e+00> : vector<8x32xf32>
    %97 = tpu.matmul %95, %96, %cst_31 {dimension_numbers = #tpu.dot_dimension_numbers<[1], [0], [0], [1], [0, 0, 1, 1], [], []>} : vector<8x8xbf16>, vector<8x32xbf16>, vector<8x32xf32> -> vector<8x32xf32>
    %98 = arith.addf %74, %97 : vector<8x32xf32>
    %99 = vector.extract_strided_slice %23 {offsets = [0, 24], sizes = [8, 8], strides = [1, 1]} : vector<8x32xbf16> to vector<8x8xbf16>
    %100 = vector.extract_strided_slice %24 {offsets = [0, 24], sizes = [8, 8], strides = [1, 1]} : vector<8x32xbf16> to vector<8x8xbf16>
    %cst_32 = arith.constant dense<0.000000e+00> : vector<8x8xf32>
    %101 = tpu.matmul %99, %100, %cst_32 {dimension_numbers = #tpu.dot_dimension_numbers<[1], [1], [0], [0], [0, 0, 1, 0], [], []>} : vector<8x8xbf16>, vector<8x8xbf16>, vector<8x8xf32> -> vector<8x8xf32>
    %cst_33 = arith.constant 0.353553385 : f32
    %102 = vector.broadcast %cst_33 : f32 to vector<8x8xf32>
    %103 = arith.mulf %101, %102 : vector<8x8xf32>
    %104 = vector.broadcast %20 : vector<1x8xf32> to vector<8x8xf32>
    %105 = arith.addf %103, %104 : vector<8x8xf32>
    %cst_34 = arith.constant dense<0xFF800000> : vector<8xf32>
    %106 = vector.multi_reduction <maximumf>, %105, %cst_34 [1] : vector<8x8xf32> to vector<8xf32>
    %107 = vector.shape_cast %106 : vector<8xf32> to vector<8x1xf32>
    %108 = vector.broadcast %107 : vector<8x1xf32> to vector<8x8xf32>
    %109 = arith.subf %105, %108 : vector<8x8xf32>
    %110 = math.exp %109 : vector<8x8xf32>
    %cst_35 = arith.constant dense<0.000000e+00> : vector<8xf32>
    %111 = vector.multi_reduction <add>, %110, %cst_35 [1] : vector<8x8xf32> to vector<8xf32>
    %112 = vector.shape_cast %111 : vector<8xf32> to vector<8x1xf32>
    %113 = tpu.reciprocal %112 {approx = true} : vector<8x1xf32> -> vector<8x1xf32>
    %114 = vector.broadcast %113 : vector<8x1xf32> to vector<8x8xf32>
    %115 = arith.mulf %110, %114 : vector<8x8xf32>
    %116 = arith.truncf %115 : vector<8x8xf32> to vector<8x8xbf16>
    %117 = vector.extract_strided_slice %25 {offsets = [0, 24], sizes = [8, 8], strides = [1, 1]} : vector<8x32xbf16> to vector<8x8xbf16>
    %cst_36 = arith.constant dense<0.000000e+00> : vector<8x8xf32>
    %118 = tpu.matmul %116, %117, %cst_36 {dimension_numbers = #tpu.dot_dimension_numbers<[1], [0], [0], [1], [0, 0, 1, 1], [], []>} : vector<8x8xbf16>, vector<8x8xbf16>, vector<8x8xf32> -> vector<8x8xf32>
    %119 = arith.truncf %118 : vector<8x8xf32> to vector<8x8xbf16>
    %120 = vector.extract_strided_slice %22 {offsets = [24, 0], sizes = [8, 32], strides = [1, 1]} : vector<32x32xbf16> to vector<8x32xbf16>
    %cst_37 = arith.constant dense<0.000000e+00> : vector<8x32xf32>
    %121 = tpu.matmul %119, %120, %cst_37 {dimension_numbers = #tpu.dot_dimension_numbers<[1], [0], [0], [1], [0, 0, 1, 1], [], []>} : vector<8x8xbf16>, vector<8x32xbf16>, vector<8x32xf32> -> vector<8x32xf32>
    %122 = arith.addf %98, %121 : vector<8x32xf32>
    %c0_38 = arith.constant 0 : index
    %c0_39 = arith.constant 0 : index
    %c0_40 = arith.constant 0 : index
    %123 = vector.load %arg5[%c0_38, %c0_39, %c0_40] : memref<1x1x32xf32, #tpu.memory_space<vmem>>, vector<1x1x32xf32>
    %124 = vector.shape_cast %123 : vector<1x1x32xf32> to vector<1x32xf32>
    %125 = vector.broadcast %124 : vector<1x32xf32> to vector<8x32xf32>
    %126 = arith.addf %122, %125 : vector<8x32xf32>
    %127 = arith.addf %126, %7 : vector<8x32xf32>
    %c0_41 = arith.constant 0 : index
    %c0_42 = arith.constant 0 : index
    %c0_43 = arith.constant 0 : index
    %128 = vector.load %arg10[%c0_41, %c0_42, %c0_43] : memref<1x1x32xf32, #tpu.memory_space<vmem>>, vector<1x1x32xf32>
    %129 = vector.shape_cast %128 : vector<1x1x32xf32> to vector<1x32xf32>
    %c0_44 = arith.constant 0 : index
    %c0_45 = arith.constant 0 : index
    %c0_46 = arith.constant 0 : index
    %130 = vector.load %arg11[%c0_44, %c0_45, %c0_46] : memref<1x1x32xf32, #tpu.memory_space<vmem>>, vector<1x1x32xf32>
    %131 = vector.shape_cast %130 : vector<1x1x32xf32> to vector<1x32xf32>
    %cst_47 = arith.constant dense<0.000000e+00> : vector<8xf32>
    %132 = vector.multi_reduction <add>, %127, %cst_47 [1] : vector<8x32xf32> to vector<8xf32>
    %133 = vector.shape_cast %132 : vector<8xf32> to vector<8x1xf32>
    %cst_48 = arith.constant 3.200000e+01 : f32
    %134 = vector.broadcast %cst_48 : f32 to vector<8x1xf32>
    %135 = arith.divf %133, %134 : vector<8x1xf32>
    %136 = vector.broadcast %135 : vector<8x1xf32> to vector<8x32xf32>
    %137 = arith.subf %127, %136 : vector<8x32xf32>
    %138 = arith.mulf %137, %137 : vector<8x32xf32>
    %cst_49 = arith.constant dense<0.000000e+00> : vector<8xf32>
    %139 = vector.multi_reduction <add>, %138, %cst_49 [1] : vector<8x32xf32> to vector<8xf32>
    %140 = vector.shape_cast %139 : vector<8xf32> to vector<8x1xf32>
    %cst_50 = arith.constant 3.200000e+01 : f32
    %141 = vector.broadcast %cst_50 : f32 to vector<8x1xf32>
    %142 = arith.divf %140, %141 : vector<8x1xf32>
    %cst_51 = arith.constant 9.99999974E-6 : f32
    %143 = vector.broadcast %cst_51 : f32 to vector<8x1xf32>
    %144 = arith.addf %142, %143 : vector<8x1xf32>
    %145 = math.rsqrt %144 : vector<8x1xf32>
    %146 = vector.broadcast %145 : vector<8x1xf32> to vector<8x32xf32>
    %147 = arith.mulf %137, %146 : vector<8x32xf32>
    %148 = vector.broadcast %129 : vector<1x32xf32> to vector<8x32xf32>
    %149 = arith.mulf %147, %148 : vector<8x32xf32>
    %150 = vector.broadcast %131 : vector<1x32xf32> to vector<8x32xf32>
    %151 = arith.addf %149, %150 : vector<8x32xf32>
    %152 = arith.truncf %151 : vector<8x32xf32> to vector<8x32xbf16>
    %c0_52 = arith.constant 0 : index
    %c0_53 = arith.constant 0 : index
    %c0_54 = arith.constant 0 : index
    %153 = vector.load %arg6[%c0_52, %c0_53, %c0_54] : memref<1x32x64xbf16, #tpu.memory_space<vmem>>, vector<1x32x64xbf16>
    %154 = vector.shape_cast %153 : vector<1x32x64xbf16> to vector<32x64xbf16>
    %cst_55 = arith.constant dense<0.000000e+00> : vector<8x64xf32>
    %155 = tpu.matmul %152, %154, %cst_55 {dimension_numbers = #tpu.dot_dimension_numbers<[1], [0], [0], [1], [0, 0, 1, 1], [], []>} : vector<8x32xbf16>, vector<32x64xbf16>, vector<8x64xf32> -> vector<8x64xf32>
    %c0_56 = arith.constant 0 : index
    %c0_57 = arith.constant 0 : index
    %c0_58 = arith.constant 0 : index
    %156 = vector.load %arg7[%c0_56, %c0_57, %c0_58] : memref<1x1x64xf32, #tpu.memory_space<vmem>>, vector<1x1x64xf32>
    %157 = vector.shape_cast %156 : vector<1x1x64xf32> to vector<1x64xf32>
    %158 = vector.broadcast %157 : vector<1x64xf32> to vector<8x64xf32>
    %159 = arith.addf %155, %158 : vector<8x64xf32>
    %cst_59 = arith.constant 0.000000e+00 : f32
    %160 = vector.broadcast %cst_59 : f32 to vector<8x64xf32>
    %161 = arith.maximumf %159, %160 : vector<8x64xf32>
    %162 = arith.truncf %161 : vector<8x64xf32> to vector<8x64xbf16>
    %c0_60 = arith.constant 0 : index
    %c0_61 = arith.constant 0 : index
    %c0_62 = arith.constant 0 : index
    %163 = vector.load %arg8[%c0_60, %c0_61, %c0_62] : memref<1x64x32xbf16, #tpu.memory_space<vmem>>, vector<1x64x32xbf16>
    %164 = vector.shape_cast %163 : vector<1x64x32xbf16> to vector<64x32xbf16>
    %cst_63 = arith.constant dense<0.000000e+00> : vector<8x32xf32>
    %165 = tpu.matmul %162, %164, %cst_63 {dimension_numbers = #tpu.dot_dimension_numbers<[1], [0], [0], [1], [0, 0, 1, 1], [], []>} : vector<8x64xbf16>, vector<64x32xbf16>, vector<8x32xf32> -> vector<8x32xf32>
    %c0_64 = arith.constant 0 : index
    %c0_65 = arith.constant 0 : index
    %c0_66 = arith.constant 0 : index
    %166 = vector.load %arg9[%c0_64, %c0_65, %c0_66] : memref<1x1x32xf32, #tpu.memory_space<vmem>>, vector<1x1x32xf32>
    %167 = vector.shape_cast %166 : vector<1x1x32xf32> to vector<1x32xf32>
    %168 = vector.broadcast %167 : vector<1x32xf32> to vector<8x32xf32>
    %169 = arith.addf %165, %168 : vector<8x32xf32>
    %170 = arith.addf %151, %169 : vector<8x32xf32>
    %c0_67 = arith.constant 0 : index
    %c0_68 = arith.constant 0 : index
    %c0_69 = arith.constant 0 : index
    %171 = vector.load %arg12[%c0_67, %c0_68, %c0_69] : memref<1x1x32xf32, #tpu.memory_space<vmem>>, vector<1x1x32xf32>
    %172 = vector.shape_cast %171 : vector<1x1x32xf32> to vector<1x32xf32>
    %c0_70 = arith.constant 0 : index
    %c0_71 = arith.constant 0 : index
    %c0_72 = arith.constant 0 : index
    %173 = vector.load %arg13[%c0_70, %c0_71, %c0_72] : memref<1x1x32xf32, #tpu.memory_space<vmem>>, vector<1x1x32xf32>
    %174 = vector.shape_cast %173 : vector<1x1x32xf32> to vector<1x32xf32>
    %cst_73 = arith.constant dense<0.000000e+00> : vector<8xf32>
    %175 = vector.multi_reduction <add>, %170, %cst_73 [1] : vector<8x32xf32> to vector<8xf32>
    %176 = vector.shape_cast %175 : vector<8xf32> to vector<8x1xf32>
    %cst_74 = arith.constant 3.200000e+01 : f32
    %177 = vector.broadcast %cst_74 : f32 to vector<8x1xf32>
    %178 = arith.divf %176, %177 : vector<8x1xf32>
    %179 = vector.broadcast %178 : vector<8x1xf32> to vector<8x32xf32>
    %180 = arith.subf %170, %179 : vector<8x32xf32>
    %181 = arith.mulf %180, %180 : vector<8x32xf32>
    %cst_75 = arith.constant dense<0.000000e+00> : vector<8xf32>
    %182 = vector.multi_reduction <add>, %181, %cst_75 [1] : vector<8x32xf32> to vector<8xf32>
    %183 = vector.shape_cast %182 : vector<8xf32> to vector<8x1xf32>
    %cst_76 = arith.constant 3.200000e+01 : f32
    %184 = vector.broadcast %cst_76 : f32 to vector<8x1xf32>
    %185 = arith.divf %183, %184 : vector<8x1xf32>
    %cst_77 = arith.constant 9.99999974E-6 : f32
    %186 = vector.broadcast %cst_77 : f32 to vector<8x1xf32>
    %187 = arith.addf %185, %186 : vector<8x1xf32>
    %188 = math.rsqrt %187 : vector<8x1xf32>
    %189 = vector.broadcast %188 : vector<8x1xf32> to vector<8x32xf32>
    %190 = arith.mulf %180, %189 : vector<8x32xf32>
    %191 = vector.broadcast %172 : vector<1x32xf32> to vector<8x32xf32>
    %192 = arith.mulf %190, %191 : vector<8x32xf32>
    %193 = vector.broadcast %174 : vector<1x32xf32> to vector<8x32xf32>
    %194 = arith.addf %192, %193 : vector<8x32xf32>
    %c1_i32 = arith.constant 1 : i32
    %195 = arith.cmpi slt, %arg0, %c1_i32 : i32
    %196 = arith.extui %195 : i1 to i32
    %c0_i32_78 = arith.constant 0 : i32
    %197 = arith.cmpi ne, %196, %c0_i32_78 : i32
    scf.if %197 {
      %c0_81 = arith.constant 0 : index
      %c0_82 = arith.constant 0 : index
      %201 = vector.load %arg15[%c0_81, %c0_82] : memref<8x32xf32, #tpu.memory_space<vmem>>, vector<8x32xf32>
      tpu.vector_store %arg15[%c0_81, %c0_82], %194 {strides = array<i32>} : memref<8x32xf32, #tpu.memory_space<vmem>>, vector<8x32xf32>,
    } else {
    }
    %c1_i32_79 = arith.constant 1 : i32
    %198 = arith.cmpi eq, %arg0, %c1_i32_79 : i32
    %199 = arith.extui %198 : i1 to i32
    %c0_i32_80 = arith.constant 0 : i32
    %200 = arith.cmpi ne, %199, %c0_i32_80 : i32
    scf.if %200 {
      %c0_81 = arith.constant 0 : index
      %c0_82 = arith.constant 0 : index
      %201 = vector.load %arg14[%c0_81, %c0_82] : memref<8x32xf32, #tpu.memory_space<vmem>>, vector<8x32xf32>
      tpu.vector_store %arg14[%c0_81, %c0_82], %194 {strides = array<i32>} : memref<8x32xf32, #tpu.memory_space<vmem>>, vector<8x32xf32>,
    } else {
    }
    return
  }
  func.func @transform_0(%arg0: i32) -> (i32, i32) {
    %c0_i32 = arith.constant 0 : i32
    %c0_i32_0 = arith.constant 0 : i32
    %c0_i32_1 = arith.constant 0 : i32
    return %c0_i32, %c0_i32_0 : i32, i32
  }
  func.func @transform_1(%arg0: i32) -> (i32, i32, i32) {
    %c0_i32 = arith.constant 0 : i32
    %c0_i32_0 = arith.constant 0 : i32
    %c0_i32_1 = arith.constant 0 : i32
    return %arg0, %c0_i32, %c0_i32_0 : i32, i32, i32
  }
  func.func @transform_2(%arg0: i32) -> (i32, i32, i32) {
    %c0_i32 = arith.constant 0 : i32
    %c0_i32_0 = arith.constant 0 : i32
    %c0_i32_1 = arith.constant 0 : i32
    return %arg0, %c0_i32, %c0_i32_0 : i32, i32, i32
  }
  func.func @transform_3(%arg0: i32) -> (i32, i32, i32) {
    %c0_i32 = arith.constant 0 : i32
    %c0_i32_0 = arith.constant 0 : i32
    %c0_i32_1 = arith.constant 0 : i32
    return %arg0, %c0_i32, %c0_i32_0 : i32, i32, i32
  }
  func.func @transform_4(%arg0: i32) -> (i32, i32, i32) {
    %c0_i32 = arith.constant 0 : i32
    %c0_i32_0 = arith.constant 0 : i32
    %c0_i32_1 = arith.constant 0 : i32
    return %arg0, %c0_i32, %c0_i32_0 : i32, i32, i32
  }
  func.func @transform_5(%arg0: i32) -> (i32, i32, i32) {
    %c0_i32 = arith.constant 0 : i32
    %c0_i32_0 = arith.constant 0 : i32
    %c0_i32_1 = arith.constant 0 : i32
    return %arg0, %c0_i32, %c0_i32_0 : i32, i32, i32
  }
  func.func @transform_6(%arg0: i32) -> (i32, i32, i32) {
    %c0_i32 = arith.constant 0 : i32
    %c0_i32_0 = arith.constant 0 : i32
    %c0_i32_1 = arith.constant 0 : i32
    return %arg0, %c0_i32, %c0_i32_0 : i32, i32, i32
  }
  func.func @transform_7(%arg0: i32) -> (i32, i32, i32) {
    %c0_i32 = arith.constant 0 : i32
    %c0_i32_0 = arith.constant 0 : i32
    %c0_i32_1 = arith.constant 0 : i32
    return %arg0, %c0_i32, %c0_i32_0 : i32, i32, i32
  }
  func.func @transform_8(%arg0: i32) -> (i32, i32, i32) {
    %c0_i32 = arith.constant 0 : i32
    %c0_i32_0 = arith.constant 0 : i32
    %c0_i32_1 = arith.constant 0 : i32
    return %arg0, %c0_i32, %c0_i32_0 : i32, i32, i32
  }
  func.func @transform_9(%arg0: i32) -> (i32, i32, i32) {
    %c0_i32 = arith.constant 0 : i32
    %c0_i32_0 = arith.constant 0 : i32
    %c0_i32_1 = arith.constant 0 : i32
    return %arg0, %c0_i32, %c0_i32_0 : i32, i32, i32
  }
  func.func @transform_10(%arg0: i32) -> (i32, i32, i32) {
    %c0_i32 = arith.constant 0 : i32
    %c0_i32_0 = arith.constant 0 : i32
    %c0_i32_1 = arith.constant 0 : i32
    return %arg0, %c0_i32, %c0_i32_0 : i32, i32, i32
  }
  func.func @transform_11(%arg0: i32) -> (i32, i32, i32) {
    %c0_i32 = arith.constant 0 : i32
    %c0_i32_0 = arith.constant 0 : i32
    %c0_i32_1 = arith.constant 0 : i32
    return %arg0, %c0_i32, %c0_i32_0 : i32, i32, i32
  }
  func.func @transform_12(%arg0: i32) -> (i32, i32, i32) {
    %c0_i32 = arith.constant 0 : i32
    %c0_i32_0 = arith.constant 0 : i32
    %c0_i32_1 = arith.constant 0 : i32
    return %arg0, %c0_i32, %c0_i32_0 : i32, i32, i32
  }
  func.func @transform_13(%arg0: i32) -> (i32, i32) {
    %c0_i32 = arith.constant 0 : i32
    %c0_i32_0 = arith.constant 0 : i32
    %c0_i32_1 = arith.constant 0 : i32
    return %c0_i32, %c0_i32_0 : i32, i32
  }
}

</mosaic_0001>

<llo_original>
// kernel: mha_block_forward.1
$region0: #{mha_block_forward.1}
  #allocation0 [shape = 'u32[]', space=smem, size = 0x4, offset = 0x4, fixed_abs, tag = 'smem constant byte address 0x4 - core index']
  #allocation1 [shape = 'u32[144,128]{1,0:T(1,128)}', space=vmem, size = 0x12000, scoped, tag = 'internal scratch']
  #allocation2 [shape = 'f32[8,32]{1,0:T(8,128)}', space=vmem, size = 0x1000, scoped, tag = 'scratch operand']
  %s0 = inlined_call_operand.vmem [shape: f32[8,32], index: 0, kind: input, shape index: {}]
  %s1 = inlined_call_operand.hbm [shape: bf16[2,32,96], index: 1, kind: input, shape index: {}]
  %s2 = inlined_call_operand.vmem [shape: f32[2,1,96], index: 2, kind: input, shape index: {}]
  %s3 = inlined_call_operand.hbm [shape: bf16[2,32,32], index: 3, kind: input, shape index: {}]
  %s4 = inlined_call_operand.vmem [shape: f32[2,1,32], index: 4, kind: input, shape index: {}]
  %s5 = inlined_call_operand.hbm [shape: bf16[2,32,64], index: 5, kind: input, shape index: {}]
  %s6 = inlined_call_operand.vmem [shape: f32[2,1,64], index: 6, kind: input, shape index: {}]
  %s7 = inlined_call_operand.vmem [shape: bf16[2,64,32], index: 7, kind: input, shape index: {}]
  %s8 = inlined_call_operand.vmem [shape: f32[2,1,32], index: 8, kind: input, shape index: {}]
  %s9 = inlined_call_operand.vmem [shape: f32[2,1,32], index: 9, kind: input, shape index: {}, may-alias: {9,11}]
  %s10 = inlined_call_operand.vmem [shape: f32[2,1,32], index: 10, kind: input, shape index: {}, may-alias: {10,12}]
  %s11 = inlined_call_operand.vmem [shape: f32[2,1,32], index: 11, kind: input, shape index: {}, may-alias: {9,11}]
  %s12 = inlined_call_operand.vmem [shape: f32[2,1,32], index: 12, kind: input, shape index: {}, may-alias: {10,12}]
  %s13 = inlined_call_operand.hbm [shape: f32[8,32], index: 13, kind: output, shape index: {}]
  %s14 = sld [smem:[#allocation0]]
  $region109: #{mha_block_forward.1} parent=0
    _
  %s16 = ssub.s32 1, %s14
  %s17 = scalar_select 0, %s16, %s14
  $region1: #{mha_block_forward.1} parent=0
    #allocation3 [shape = 'u8[16384]{0}', space=vmem, size = 0x4000, scoped, tag = 'input window, operand 1']
    #allocation4 [shape = 's32[2]{0}', space=sflag, size = 0x8, scoped, tag = 'scoped memory for mha_block_forward.1']
    #allocation5 [shape = 's32[2]{0}', space=sflag, size = 0x8, scoped, tag = 'scoped memory for mha_block_forward.1']
    #allocation6 [shape = 'u8[16384]{0}', space=vmem, size = 0x4000, scoped, tag = 'input window, operand 3']
    #allocation7 [shape = 's32[2]{0}', space=sflag, size = 0x8, scoped, tag = 'scoped memory for mha_block_forward.1']
    #allocation8 [shape = 'u8[16384]{0}', space=vmem, size = 0x4000, scoped, tag = 'input window, operand 5']
    #allocation9 [shape = 'u8[4096]{0}', space=vmem, size = 0x1000, scoped, tag = 'output window, operand 0, single buffered']
    %18 = vsyncpa [#allocation4], 0
    %s19 = scalar_lea.sflag [#allocation4], 1
    %20 = vsyncpa %s19, 0
    %21 = vsyncpa [#allocation7], 0
    %s22 = scalar_lea.sflag [#allocation7], 1
    %23 = vsyncpa %s22, 0
    %24 = vsyncpa [#allocation5], 0
    loop: start=0, step=1, limit=4
    $region2: #{mha_block_forward.1} parent=1 // loop_pre_header
      _
    $region3: #{mha_block_forward.1} parent=1 // loop_header
      %s26 = sphi 0, %s30
      %p27 = scmp.ge.s32.totalorder %s26, 4
      %s34 = sphi 0, %s34
      %s36 = sphi 0, %s34
      %s37 = sphi 0, %s36
      %s51 = sphi 0, %s37
      %s57 = sphi 0, %s59
      %s60 = sphi 0, %s57
      %s61 = sphi 0, %s60
      %s77 = sphi 0, %s61
      %s83 = sphi 0, %s85
      %s86 = sphi 0, %s83
      %s87 = sphi 0, %s86
      %s103 = sphi 0, %s87
      %s109 = sphi 0, %s111
      %s112 = sphi 0, %s109
      %s113 = sphi 0, %s112
      %s129 = sphi 0, %s113
      %s135 = sphi 0, %s137
      %s138 = sphi 0, %s135
      %s139 = sphi 0, %s138
      %s155 = sphi 0, %s139
      %s161 = sphi 0, %s163
      %s164 = sphi 0, %s161
      %s165 = sphi 0, %s164
      %s181 = sphi 0, %s165
      %s187 = sphi 0, %s189
      %s190 = sphi 0, %s187
      %s191 = sphi 0, %s190
      %s207 = sphi 0, %s191
      %s213 = sphi 0, %s215
      %s216 = sphi 0, %s213
      %s217 = sphi 0, %s216
      %s233 = sphi 0, %s217
      %s239 = sphi 0, %s241
      %s242 = sphi 0, %s239
      %s243 = sphi 0, %s242
      %s259 = sphi 0, %s243
      %s265 = sphi 0, %s267
      %s268 = sphi 0, %s265
      %s269 = sphi 0, %s268
      %s285 = sphi 0, %s269
      %s291 = sphi 0, %s293
      %s294 = sphi 0, %s291
      %s295 = sphi 0, %s294
      %s311 = sphi 0, %s295
      %s317 = sphi 0, %s319
      %s320 = sphi 0, %s317
      %s321 = sphi 0, %s320
      %s337 = sphi 0, %s321
      %s343 = sphi 0, %s345
      %s346 = sphi 0, %s343
      %s347 = sphi 0, %s346
      %s363 = sphi 0, %s347
      %s367 = sphi 0, %s367
      %s369 = sphi 0, %s367
      %s370 = sphi 0, %s369
      %s384 = sphi 0, %s370
    $region4: #{mha_block_forward.1} parent=1 // loop_header_branch
      %29 = sbr.rel (%p27) target = $region8
    $region5: #{mha_block_forward.1} parent=1 // loop_body
      %s31 = ssub.s32 %s26, 1
      %s32 = ssub.s32 %s26, 2
      %s33 = sadd.s32 %s26, 1
      %s35 = sadd.s32 %s34, 1
      %p38 = scmp.eq.s32.totalorder %s26, 1
      %p39 = scmp.ne.s32.totalorder %s34, %s36
      %p40 = scmp.eq.s32.totalorder %s26, 0
      %p41 = por %p39, %p40
      %p42 = scmp.ne.s32.totalorder %s34, %s36
      %p43 = scmp.eq.s32.totalorder %s31, 1
      %p44 = por %p42, %p43
      %p45 = scmp.ne.s32.totalorder %s36, %s37
      %p46 = scmp.eq.s32.totalorder %s31, 0
      %p47 = por %p45, %p46
      %p48 = scmp.ne.s32.totalorder %s36, %s37
      %p49 = scmp.eq.s32.totalorder %s32, 1
      %p50 = por %p48, %p49
      %p52 = scmp.ne.s32.totalorder %s37, %s51
      %p53 = scmp.eq.s32.totalorder %s32, 0
      %p54 = por %p52, %p53
      %s55 = ssub.s32 %s26, %s33
      %p56 = scmp.eq.s32.totalorder %s55, 0
      %s58 = sadd.s32 %s57, 1
      %s59 = scalar_select %p56, %s57, %s58
      %p62 = pneg %p56
      %p63 = scmp.eq.s32.totalorder %s26, 1
      %p64 = por %p62, %p63
      %p65 = scmp.ne.s32.totalorder %s57, %s60
      %p66 = scmp.eq.s32.totalorder %s26, 0
      %p67 = por %p65, %p66
      %p68 = scmp.ne.s32.totalorder %s57, %s60
      %p69 = scmp.eq.s32.totalorder %s31, 1
      %p70 = por %p68, %p69
      %p71 = scmp.ne.s32.totalorder %s60, %s61
      %p72 = scmp.eq.s32.totalorder %s31, 0
      %p73 = por %p71, %p72
      %p74 = scmp.ne.s32.totalorder %s60, %s61
      %p75 = scmp.eq.s32.totalorder %s32, 1
      %p76 = por %p74, %p75
      %p78 = scmp.ne.s32.totalorder %s61, %s77
      %p79 = scmp.eq.s32.totalorder %s32, 0
      %p80 = por %p78, %p79
      %s81 = ssub.s32 %s26, %s33
      %p82 = scmp.eq.s32.totalorder %s81, 0
      %s84 = sadd.s32 %s83, 1
      %s85 = scalar_select %p82, %s83, %s84
      %p88 = pneg %p82
      %p89 = scmp.eq.s32.totalorder %s26, 1
      %p90 = por %p88, %p89
      %p91 = scmp.ne.s32.totalorder %s83, %s86
      %p92 = scmp.eq.s32.totalorder %s26, 0
      %p93 = por %p91, %p92
      %p94 = scmp.ne.s32.totalorder %s83, %s86
      %p95 = scmp.eq.s32.totalorder %s31, 1
      %p96 = por %p94, %p95
      %p97 = scmp.ne.s32.totalorder %s86, %s87
      %p98 = scmp.eq.s32.totalorder %s31, 0
      %p99 = por %p97, %p98
      %p100 = scmp.ne.s32.totalorder %s86, %s87
      %p101 = scmp.eq.s32.totalorder %s32, 1
      %p102 = por %p100, %p101
      %p104 = scmp.ne.s32.totalorder %s87, %s103
      %p105 = scmp.eq.s32.totalorder %s32, 0
      %p106 = por %p104, %p105
      %s107 = ssub.s32 %s26, %s33
      %p108 = scmp.eq.s32.totalorder %s107, 0
      %s110 = sadd.s32 %s109, 1
      %s111 = scalar_select %p108, %s109, %s110
      %p114 = pneg %p108
      %p115 = scmp.eq.s32.totalorder %s26, 1
      %p116 = por %p114, %p115
      %p117 = scmp.ne.s32.totalorder %s109, %s112
      %p118 = scmp.eq.s32.totalorder %s26, 0
      %p119 = por %p117, %p118
      %p120 = scmp.ne.s32.totalorder %s109, %s112
      %p121 = scmp.eq.s32.totalorder %s31, 1
      %p122 = por %p120, %p121
      %p123 = scmp.ne.s32.totalorder %s112, %s113
      %p124 = scmp.eq.s32.totalorder %s31, 0
      %p125 = por %p123, %p124
      %p126 = scmp.ne.s32.totalorder %s112, %s113
      %p127 = scmp.eq.s32.totalorder %s32, 1
      %p128 = por %p126, %p127
      %p130 = scmp.ne.s32.totalorder %s113, %s129
      %p131 = scmp.eq.s32.totalorder %s32, 0
      %p132 = por %p130, %p131
      %s133 = ssub.s32 %s26, %s33
      %p134 = scmp.eq.s32.totalorder %s133, 0
      %s136 = sadd.s32 %s135, 1
      %s137 = scalar_select %p134, %s135, %s136
      %p140 = pneg %p134
      %p141 = scmp.eq.s32.totalorder %s26, 1
      %p142 = por %p140, %p141
      %p143 = scmp.ne.s32.totalorder %s135, %s138
      %p144 = scmp.eq.s32.totalorder %s26, 0
      %p145 = por %p143, %p144
      %p146 = scmp.ne.s32.totalorder %s135, %s138
      %p147 = scmp.eq.s32.totalorder %s31, 1
      %p148 = por %p146, %p147
      %p149 = scmp.ne.s32.totalorder %s138, %s139
      %p150 = scmp.eq.s32.totalorder %s31, 0
      %p151 = por %p149, %p150
      %p152 = scmp.ne.s32.totalorder %s138, %s139
      %p153 = scmp.eq.s32.totalorder %s32, 1
      %p154 = por %p152, %p153
      %p156 = scmp.ne.s32.totalorder %s139, %s155
      %p157 = scmp.eq.s32.totalorder %s32, 0
      %p158 = por %p156, %p157
      %s159 = ssub.s32 %s26, %s33
      %p160 = scmp.eq.s32.totalorder %s159, 0
      %s162 = sadd.s32 %s161, 1
      %s163 = scalar_select %p160, %s161, %s162
      %p166 = pneg %p160
      %p167 = scmp.eq.s32.totalorder %s26, 1
      %p168 = por %p166, %p167
      %p169 = scmp.ne.s32.totalorder %s161, %s164
      %p170 = scmp.eq.s32.totalorder %s26, 0
      %p171 = por %p169, %p170
      %p172 = scmp.ne.s32.totalorder %s161, %s164
      %p173 = scmp.eq.s32.totalorder %s31, 1
      %p174 = por %p172, %p173
      %p175 = scmp.ne.s32.totalorder %s164, %s165
      %p176 = scmp.eq.s32.totalorder %s31, 0
      %p177 = por %p175, %p176
      %p178 = scmp.ne.s32.totalorder %s164, %s165
      %p179 = scmp.eq.s32.totalorder %s32, 1
      %p180 = por %p178, %p179
      %p182 = scmp.ne.s32.totalorder %s165, %s181
      %p183 = scmp.eq.s32.totalorder %s32, 0
      %p184 = por %p182, %p183
      %s185 = ssub.s32 %s26, %s33
      %p186 = scmp.eq.s32.totalorder %s185, 0
      %s188 = sadd.s32 %s187, 1
      %s189 = scalar_select %p186, %s187, %s188
      %p192 = pneg %p186
      %p193 = scmp.eq.s32.totalorder %s26, 1
      %p194 = por %p192, %p193
      %p195 = scmp.ne.s32.totalorder %s187, %s190
      %p196 = scmp.eq.s32.totalorder %s26, 0
      %p197 = por %p195, %p196
      %p198 = scmp.ne.s32.totalorder %s187, %s190
      %p199 = scmp.eq.s32.totalorder %s31, 1
      %p200 = por %p198, %p199
      %p201 = scmp.ne.s32.totalorder %s190, %s191
      %p202 = scmp.eq.s32.totalorder %s31, 0
      %p203 = por %p201, %p202
      %p204 = scmp.ne.s32.totalorder %s190, %s191
      %p205 = scmp.eq.s32.totalorder %s32, 1
      %p206 = por %p204, %p205
      %p208 = scmp.ne.s32.totalorder %s191, %s207
      %p209 = scmp.eq.s32.totalorder %s32, 0
      %p210 = por %p208, %p209
      %s211 = ssub.s32 %s26, %s33
      %p212 = scmp.eq.s32.totalorder %s211, 0
      %s214 = sadd.s32 %s213, 1
      %s215 = scalar_select %p212, %s213, %s214
      %p218 = pneg %p212
      %p219 = scmp.eq.s32.totalorder %s26, 1
      %p220 = por %p218, %p219
      %p221 = scmp.ne.s32.totalorder %s213, %s216
      %p222 = scmp.eq.s32.totalorder %s26, 0
      %p223 = por %p221, %p222
      %p224 = scmp.ne.s32.totalorder %s213, %s216
      %p225 = scmp.eq.s32.totalorder %s31, 1
      %p226 = por %p224, %p225
      %p227 = scmp.ne.s32.totalorder %s216, %s217
      %p228 = scmp.eq.s32.totalorder %s31, 0
      %p229 = por %p227, %p228
      %p230 = scmp.ne.s32.totalorder %s216, %s217
      %p231 = scmp.eq.s32.totalorder %s32, 1
      %p232 = por %p230, %p231
      %p234 = scmp.ne.s32.totalorder %s217, %s233
      %p235 = scmp.eq.s32.totalorder %s32, 0
      %p236 = por %p234, %p235
      %s237 = ssub.s32 %s26, %s33
      %p238 = scmp.eq.s32.totalorder %s237, 0
      %s240 = sadd.s32 %s239, 1
      %s241 = scalar_select %p238, %s239, %s240
      %p244 = pneg %p238
      %p245 = scmp.eq.s32.totalorder %s26, 1
      %p246 = por %p244, %p245
      %p247 = scmp.ne.s32.totalorder %s239, %s242
      %p248 = scmp.eq.s32.totalorder %s26, 0
      %p249 = por %p247, %p248
      %p250 = scmp.ne.s32.totalorder %s239, %s242
      %p251 = scmp.eq.s32.totalorder %s31, 1
      %p252 = por %p250, %p251
      %p253 = scmp.ne.s32.totalorder %s242, %s243
      %p254 = scmp.eq.s32.totalorder %s31, 0
      %p255 = por %p253, %p254
      %p256 = scmp.ne.s32.totalorder %s242, %s243
      %p257 = scmp.eq.s32.totalorder %s32, 1
      %p258 = por %p256, %p257
      %p260 = scmp.ne.s32.totalorder %s243, %s259
      %p261 = scmp.eq.s32.totalorder %s32, 0
      %p262 = por %p260, %p261
      %s263 = ssub.s32 %s26, %s33
      %p264 = scmp.eq.s32.totalorder %s263, 0
      %s266 = sadd.s32 %s265, 1
      %s267 = scalar_select %p264, %s265, %s266
      %p270 = pneg %p264
      %p271 = scmp.eq.s32.totalorder %s26, 1
      %p272 = por %p270, %p271
      %p273 = scmp.ne.s32.totalorder %s265, %s268
      %p274 = scmp.eq.s32.totalorder %s26, 0
      %p275 = por %p273, %p274
      %p276 = scmp.ne.s32.totalorder %s265, %s268
      %p277 = scmp.eq.s32.totalorder %s31, 1
      %p278 = por %p276, %p277
      %p279 = scmp.ne.s32.totalorder %s268, %s269
      %p280 = scmp.eq.s32.totalorder %s31, 0
      %p281 = por %p279, %p280
      %p282 = scmp.ne.s32.totalorder %s268, %s269
      %p283 = scmp.eq.s32.totalorder %s32, 1
      %p284 = por %p282, %p283
      %p286 = scmp.ne.s32.totalorder %s269, %s285
      %p287 = scmp.eq.s32.totalorder %s32, 0
      %p288 = por %p286, %p287
      %s289 = ssub.s32 %s26, %s33
      %p290 = scmp.eq.s32.totalorder %s289, 0
      %s292 = sadd.s32 %s291, 1
      %s293 = scalar_select %p290, %s291, %s292
      %p296 = pneg %p290
      %p297 = scmp.eq.s32.totalorder %s26, 1
      %p298 = por %p296, %p297
      %p299 = scmp.ne.s32.totalorder %s291, %s294
      %p300 = scmp.eq.s32.totalorder %s26, 0
      %p301 = por %p299, %p300
      %p302 = scmp.ne.s32.totalorder %s291, %s294
      %p303 = scmp.eq.s32.totalorder %s31, 1
      %p304 = por %p302, %p303
      %p305 = scmp.ne.s32.totalorder %s294, %s295
      %p306 = scmp.eq.s32.totalorder %s31, 0
      %p307 = por %p305, %p306
      %p308 = scmp.ne.s32.totalorder %s294, %s295
      %p309 = scmp.eq.s32.totalorder %s32, 1
      %p310 = por %p308, %p309
      %p312 = scmp.ne.s32.totalorder %s295, %s311
      %p313 = scmp.eq.s32.totalorder %s32, 0
      %p314 = por %p312, %p313
      %s315 = ssub.s32 %s26, %s33
      %p316 = scmp.eq.s32.totalorder %s315, 0
      %s318 = sadd.s32 %s317, 1
      %s319 = scalar_select %p316, %s317, %s318
      %p322 = pneg %p316
      %p323 = scmp.eq.s32.totalorder %s26, 1
      %p324 = por %p322, %p323
      %p325 = scmp.ne.s32.totalorder %s317, %s320
      %p326 = scmp.eq.s32.totalorder %s26, 0
      %p327 = por %p325, %p326
      %p328 = scmp.ne.s32.totalorder %s317, %s320
      %p329 = scmp.eq.s32.totalorder %s31, 1
      %p330 = por %p328, %p329
      %p331 = scmp.ne.s32.totalorder %s320, %s321
      %p332 = scmp.eq.s32.totalorder %s31, 0
      %p333 = por %p331, %p332
      %p334 = scmp.ne.s32.totalorder %s320, %s321
      %p335 = scmp.eq.s32.totalorder %s32, 1
      %p336 = por %p334, %p335
      %p338 = scmp.ne.s32.totalorder %s321, %s337
      %p339 = scmp.eq.s32.totalorder %s32, 0
      %p340 = por %p338, %p339
      %s341 = ssub.s32 %s26, %s33
      %p342 = scmp.eq.s32.totalorder %s341, 0
      %s344 = sadd.s32 %s343, 1
      %s345 = scalar_select %p342, %s343, %s344
      %p348 = pneg %p342
      %p349 = scmp.eq.s32.totalorder %s26, 1
      %p350 = por %p348, %p349
      %p351 = scmp.ne.s32.totalorder %s343, %s346
      %p352 = scmp.eq.s32.totalorder %s26, 0
      %p353 = por %p351, %p352
      %p354 = scmp.ne.s32.totalorder %s343, %s346
      %p355 = scmp.eq.s32.totalorder %s31, 1
      %p356 = por %p354, %p355
      %p357 = scmp.ne.s32.totalorder %s346, %s347
      %p358 = scmp.eq.s32.totalorder %s31, 0
      %p359 = por %p357, %p358
      %p360 = scmp.ne.s32.totalorder %s346, %s347
      %p361 = scmp.eq.s32.totalorder %s32, 1
      %p362 = por %p360, %p361
      %p364 = scmp.ne.s32.totalorder %s347, %s363
      %p365 = scmp.eq.s32.totalorder %s32, 0
      %p366 = por %p364, %p365
      %s368 = sadd.s32 %s367, 1
      %p371 = scmp.eq.s32.totalorder %s26, 1
      %p372 = scmp.ne.s32.totalorder %s367, %s369
      %p373 = scmp.eq.s32.totalorder %s26, 0
      %p374 = por %p372, %p373
      %p375 = scmp.ne.s32.totalorder %s367, %s369
      %p376 = scmp.eq.s32.totalorder %s31, 1
      %p377 = por %p375, %p376
      %p378 = scmp.ne.s32.totalorder %s369, %s370
      %p379 = scmp.eq.s32.totalorder %s31, 0
      %p380 = por %p378, %p379
      %p381 = scmp.ne.s32.totalorder %s369, %s370
      %p382 = scmp.eq.s32.totalorder %s32, 1
      %p383 = por %p381, %p382
      %p385 = scmp.ne.s32.totalorder %s370, %s384
      %p386 = scmp.eq.s32.totalorder %s32, 0
      %p387 = por %p385, %p386
      %p388 = scmp.le.s32.totalorder 1, %s26
      %p389 = scmp.lt.s32.totalorder %s26, 3
      %p390 = pnand %p388, %p389
      %p391 = pneg %p390
      // Predicated region
      $region9: #{mha_block_forward.1} parent=5 // pred_check
        _
      $region10: #{mha_block_forward.1} parent=5 // pred_check_branch
        %393 = sbr.rel (%p390) target = $region12
      $region11: #{mha_block_forward.1} parent=5 // pred_region
        %s394 = ssub.s32 %s26, 1
        // Predicated region
        $region13: #{mha_block_forward.1} parent=11 // pred_check
          %p395 = pneg %p47
        $region14: #{mha_block_forward.1} parent=11 // pred_check_branch
          %397 = sbr.rel (%p395) target = $region16
        $region15: #{mha_block_forward.1} parent=11 // pred_region
          _
        $region16: #{mha_block_forward.1} parent=11 // pred_fallthru
          _
      $region12: #{mha_block_forward.1} parent=5 // pred_fallthru
        _
      %p398 = scmp.lt.s32.totalorder %s26, 2
      // Predicated region
      $region17: #{mha_block_forward.1} parent=5 // pred_check
        %p399 = pneg %p398
      $region18: #{mha_block_forward.1} parent=5 // pred_check_branch
        %401 = sbr.rel (%p399) target = $region20
      $region19: #{mha_block_forward.1} parent=5 // pred_region
        // Predicated region
        $region21: #{mha_block_forward.1} parent=19 // pred_check
          %p402 = pneg %p67
        $region22: #{mha_block_forward.1} parent=19 // pred_check_branch
          %404 = sbr.rel (%p402) target = $region24
        $region23: #{mha_block_forward.1} parent=19 // pred_region
          %s405 = sand.u32 %s57, 1
          %s406 = scalar_lea.sflag [#allocation4], %s405
          %s407 = sand.u32 %s57, 1
          %s408 = smul.addr %s407, 16
          %s409 = scalar_lea.vmem [#allocation3], %s408
          %s411 = ssub.s32 256, 256
          %412 = vsyncadd %s406, %s411
          %s413 = smul.addr %s26, 4
          %s414 = smul.addr %s413, 64
          %s415 = scalar_lea.hbm %s1, %s414
          %s416 = sshll.u32 %s409, 4
          %s417 = int_to_ptr.vmem [resolvable:$true] %s416
          %422 = dma.hbm_to_vmem [thread:$0]  %s415, 256, %s417, %s406, 64, 64, 4
        $region24: #{mha_block_forward.1} parent=19 // pred_fallthru
          _
        // Predicated region
        $region25: #{mha_block_forward.1} parent=19 // pred_check
          %p423 = pneg %p93
        $region26: #{mha_block_forward.1} parent=19 // pred_check_branch
          %425 = sbr.rel (%p423) target = $region28
        $region27: #{mha_block_forward.1} parent=19 // pred_region
          %p426 = scmp.lt.s32.totalorder %s26, 1
          %s427 = scalar_select %p426, %s26, 1
          %s428 = scalar_lea.vmem %s2, %s427
        $region28: #{mha_block_forward.1} parent=19 // pred_fallthru
          _
        // Predicated region
        $region29: #{mha_block_forward.1} parent=19 // pred_check
          %p429 = pneg %p119
        $region30: #{mha_block_forward.1} parent=19 // pred_check_branch
          %431 = sbr.rel (%p429) target = $region32
        $region31: #{mha_block_forward.1} parent=19 // pred_region
          %s432 = sand.u32 %s26, 1
          %s433 = scalar_lea.sflag [#allocation7], %s432
          %s434 = sand.u32 %s109, 1
          %s435 = smul.addr %s434, 16
          %s436 = scalar_lea.vmem [#allocation6], %s435
          %s438 = ssub.s32 256, 256
          %439 = vsyncadd %s433, %s438
          %s440 = smul.addr %s26, 4
          %s441 = smul.addr %s440, 64
          %s442 = scalar_lea.hbm %s3, %s441
          %s443 = sshll.u32 %s436, 4
          %s444 = int_to_ptr.vmem [resolvable:$true] %s443
          %449 = dma.hbm_to_vmem [thread:$0]  %s442, 256, %s444, %s433, 64, 64, 4
        $region32: #{mha_block_forward.1} parent=19 // pred_fallthru
          _
        // Predicated region
        $region33: #{mha_block_forward.1} parent=19 // pred_check
          %p450 = pneg %p145
        $region34: #{mha_block_forward.1} parent=19 // pred_check_branch
          %452 = sbr.rel (%p450) target = $region36
        $region35: #{mha_block_forward.1} parent=19 // pred_region
          %p453 = scmp.lt.s32.totalorder %s26, 1
          %s454 = scalar_select %p453, %s26, 1
          %s455 = scalar_lea.vmem %s4, %s454
        $region36: #{mha_block_forward.1} parent=19 // pred_fallthru
          _
        // Predicated region
        $region37: #{mha_block_forward.1} parent=19 // pred_check
          %p456 = pneg %p171
        $region38: #{mha_block_forward.1} parent=19 // pred_check_branch
          %458 = sbr.rel (%p456) target = $region40
        $region39: #{mha_block_forward.1} parent=19 // pred_region
          %s459 = sand.u32 %s26, 1
          %s460 = scalar_lea.sflag [#allocation7], %s459
          %s461 = sand.u32 %s161, 1
          %s462 = smul.addr %s461, 16
          %s463 = scalar_lea.vmem [#allocation8], %s462
          %s465 = ssub.s32 256, 256
          %466 = vsyncadd %s460, %s465
          %s467 = smul.addr %s26, 4
          %s468 = smul.addr %s467, 64
          %s469 = scalar_lea.hbm %s5, %s468
          %s470 = sshll.u32 %s463, 4
          %s471 = int_to_ptr.vmem [resolvable:$true] %s470
          %476 = dma.hbm_to_vmem [thread:$0]  %s469, 256, %s471, %s460, 64, 64, 4
        $region40: #{mha_block_forward.1} parent=19 // pred_fallthru
          _
        // Predicated region
        $region41: #{mha_block_forward.1} parent=19 // pred_check
          %p477 = pneg %p197
        $region42: #{mha_block_forward.1} parent=19 // pred_check_branch
          %479 = sbr.rel (%p477) target = $region44
        $region43: #{mha_block_forward.1} parent=19 // pred_region
          %p480 = scmp.lt.s32.totalorder %s26, 1
          %s481 = scalar_select %p480, %s26, 1
          %s482 = scalar_lea.vmem %s6, %s481
        $region44: #{mha_block_forward.1} parent=19 // pred_fallthru
          _
        // Predicated region
        $region45: #{mha_block_forward.1} parent=19 // pred_check
          %p483 = pneg %p223
        $region46: #{mha_block_forward.1} parent=19 // pred_check_branch
          %485 = sbr.rel (%p483) target = $region48
        $region47: #{mha_block_forward.1} parent=19 // pred_region
          %p486 = scmp.lt.s32.totalorder %s26, 1
          %s487 = scalar_select %p486, %s26, 1
          %s488 = smul.addr %s487, 8
          %s489 = smul.addr %s488, 4
          %s490 = scalar_lea.vmem %s7, %s489
        $region48: #{mha_block_forward.1} parent=19 // pred_fallthru
          _
        // Predicated region
        $region49: #{mha_block_forward.1} parent=19 // pred_check
          %p491 = pneg %p249
        $region50: #{mha_block_forward.1} parent=19 // pred_check_branch
          %493 = sbr.rel (%p491) target = $region52
        $region51: #{mha_block_forward.1} parent=19 // pred_region
          %p494 = scmp.lt.s32.totalorder %s26, 1
          %s495 = scalar_select %p494, %s26, 1
          %s496 = scalar_lea.vmem %s8, %s495
        $region52: #{mha_block_forward.1} parent=19 // pred_fallthru
          _
        // Predicated region
        $region53: #{mha_block_forward.1} parent=19 // pred_check
          %p497 = pneg %p275
        $region54: #{mha_block_forward.1} parent=19 // pred_check_branch
          %499 = sbr.rel (%p497) target = $region56
        $region55: #{mha_block_forward.1} parent=19 // pred_region
          %p500 = scmp.lt.s32.totalorder %s26, 1
          %s501 = scalar_select %p500, %s26, 1
          %s502 = scalar_lea.vmem %s9, %s501
        $region56: #{mha_block_forward.1} parent=19 // pred_fallthru
          _
        // Predicated region
        $region57: #{mha_block_forward.1} parent=19 // pred_check
          %p503 = pneg %p301
        $region58: #{mha_block_forward.1} parent=19 // pred_check_branch
          %505 = sbr.rel (%p503) target = $region60
        $region59: #{mha_block_forward.1} parent=19 // pred_region
          %p506 = scmp.lt.s32.totalorder %s26, 1
          %s507 = scalar_select %p506, %s26, 1
          %s508 = scalar_lea.vmem %s10, %s507
        $region60: #{mha_block_forward.1} parent=19 // pred_fallthru
          _
        // Predicated region
        $region61: #{mha_block_forward.1} parent=19 // pred_check
          %p509 = pneg %p327
        $region62: #{mha_block_forward.1} parent=19 // pred_check_branch
          %511 = sbr.rel (%p509) target = $region64
        $region63: #{mha_block_forward.1} parent=19 // pred_region
          %p512 = scmp.lt.s32.totalorder %s26, 1
          %s513 = scalar_select %p512, %s26, 1
          %s514 = scalar_lea.vmem %s11, %s513
        $region64: #{mha_block_forward.1} parent=19 // pred_fallthru
          _
        // Predicated region
        $region65: #{mha_block_forward.1} parent=19 // pred_check
          %p515 = pneg %p353
        $region66: #{mha_block_forward.1} parent=19 // pred_check_branch
          %517 = sbr.rel (%p515) target = $region68
        $region67: #{mha_block_forward.1} parent=19 // pred_region
          %p518 = scmp.lt.s32.totalorder %s26, 1
          %s519 = scalar_select %p518, %s26, 1
          %s520 = scalar_lea.vmem %s12, %s519
        $region68: #{mha_block_forward.1} parent=19 // pred_fallthru
          _
      $region20: #{mha_block_forward.1} parent=5 // pred_fallthru
        _
      %p521 = scmp.le.s32.totalorder 1, %s26
      %p522 = scmp.lt.s32.totalorder %s26, 3
      %p523 = pnand %p521, %p522
      %p524 = pneg %p523
      // Predicated region
      $region69: #{mha_block_forward.1} parent=5 // pred_check
        _
      $region70: #{mha_block_forward.1} parent=5 // pred_check_branch
        %526 = sbr.rel (%p523) target = $region72
      $region71: #{mha_block_forward.1} parent=5 // pred_region
        %s527 = ssub.s32 %s26, 1
        %s528 = sand.u32 %s60, 1
        %s529 = scalar_lea.sflag [#allocation4], %s528
        %s530 = sand.u32 %s60, 1
        %s531 = smul.addr %s530, 16
        %s532 = scalar_lea.vmem [#allocation3], %s531
        // Predicated region
        $region73: #{mha_block_forward.1} parent=71 // pred_check
          %p533 = pneg %p73
        $region74: #{mha_block_forward.1} parent=71 // pred_check_branch
          %535 = sbr.rel (%p533) target = $region76
        $region75: #{mha_block_forward.1} parent=71 // pred_region
          %536 = dma.done %s529, 256
        $region76: #{mha_block_forward.1} parent=71 // pred_fallthru
          _
        %s537 = sand.u32 %s31, 1
        %s538 = scalar_lea.sflag [#allocation7], %s537
        %s539 = sand.u32 %s112, 1
        %s540 = smul.addr %s539, 16
        %s541 = scalar_lea.vmem [#allocation6], %s540
        // Predicated region
        $region77: #{mha_block_forward.1} parent=71 // pred_check
          %p542 = pneg %p125
        $region78: #{mha_block_forward.1} parent=71 // pred_check_branch
          %544 = sbr.rel (%p542) target = $region80
        $region79: #{mha_block_forward.1} parent=71 // pred_region
          %545 = dma.done %s538, 256
        $region80: #{mha_block_forward.1} parent=71 // pred_fallthru
          _
        %s546 = sand.u32 %s31, 1
        %s547 = scalar_lea.sflag [#allocation7], %s546
        %s548 = sand.u32 %s164, 1
        %s549 = smul.addr %s548, 16
        %s550 = scalar_lea.vmem [#allocation8], %s549
        // Predicated region
        $region81: #{mha_block_forward.1} parent=71 // pred_check
          %p551 = pneg %p177
        $region82: #{mha_block_forward.1} parent=71 // pred_check_branch
          %553 = sbr.rel (%p551) target = $region84
        $region83: #{mha_block_forward.1} parent=71 // pred_region
          %554 = dma.done %s547, 256
        $region84: #{mha_block_forward.1} parent=71 // pred_fallthru
          _
        %p555 = pneg %p47
        %p556 = pneg %p44
        %s557 = sand.u32 %s60, 1
        %s558 = scalar_lea.sflag [#allocation4], %s557
        %s559 = sand.u32 %s60, 1
        %s560 = smul.addr %s559, 16
        %s561 = scalar_lea.vmem [#allocation3], %s560
        %p562 = pneg %p73
        %p563 = pneg %p70
        %p564 = scmp.lt.s32.totalorder %s31, 1
        %s565 = scalar_select %p564, %s31, 1
        %s566 = scalar_lea.vmem %s2, %s565
        %p567 = pneg %p99
        %p568 = pneg %p96
        %s569 = sand.u32 %s31, 1
        %s570 = scalar_lea.sflag [#allocation7], %s569
        %s571 = sand.u32 %s112, 1
        %s572 = smul.addr %s571, 16
        %s573 = scalar_lea.vmem [#allocation6], %s572
        %p574 = pneg %p125
        %p575 = pneg %p122
        %p576 = scmp.lt.s32.totalorder %s31, 1
        %s577 = scalar_select %p576, %s31, 1
        %s578 = scalar_lea.vmem %s4, %s577
        %p579 = pneg %p151
        %p580 = pneg %p148
        %s581 = sand.u32 %s31, 1
        %s582 = scalar_lea.sflag [#allocation7], %s581
        %s583 = sand.u32 %s164, 1
        %s584 = smul.addr %s583, 16
        %s585 = scalar_lea.vmem [#allocation8], %s584
        %p586 = pneg %p177
        %p587 = pneg %p174
        %p588 = scmp.lt.s32.totalorder %s31, 1
        %s589 = scalar_select %p588, %s31, 1
        %s590 = scalar_lea.vmem %s6, %s589
        %p591 = pneg %p203
        %p592 = pneg %p200
        %p593 = scmp.lt.s32.totalorder %s31, 1
        %s594 = scalar_select %p593, %s31, 1
        %s595 = smul.addr %s594, 8
        %s596 = smul.addr %s595, 4
        %s597 = scalar_lea.vmem %s7, %s596
        %p598 = pneg %p229
        %p599 = pneg %p226
        %p600 = scmp.lt.s32.totalorder %s31, 1
        %s601 = scalar_select %p600, %s31, 1
        %s602 = scalar_lea.vmem %s8, %s601
        %p603 = pneg %p255
        %p604 = pneg %p252
        %p605 = scmp.lt.s32.totalorder %s31, 1
        %s606 = scalar_select %p605, %s31, 1
        %s607 = scalar_lea.vmem %s9, %s606
        %p608 = pneg %p281
        %p609 = pneg %p278
        %p610 = scmp.lt.s32.totalorder %s31, 1
        %s611 = scalar_select %p610, %s31, 1
        %s612 = scalar_lea.vmem %s10, %s611
        %p613 = pneg %p307
        %p614 = pneg %p304
        %p615 = scmp.lt.s32.totalorder %s31, 1
        %s616 = scalar_select %p615, %s31, 1
        %s617 = scalar_lea.vmem %s11, %s616
        %p618 = pneg %p333
        %p619 = pneg %p330
        %p620 = scmp.lt.s32.totalorder %s31, 1
        %s621 = scalar_select %p620, %s31, 1
        %s622 = scalar_lea.vmem %s12, %s621
        %p623 = pneg %p359
        %p624 = pneg %p356
        %p625 = pneg %p380
        %p626 = pneg %p377
        %p627 = scmp.lt.s32.totalorder %s31, 1
        %s628 = scalar_select %p627, %s31, 1
        %s629 = scalar_lea.vmem %s2, %s628
        %p630 = scmp.lt.s32.totalorder %s31, 1
        %s631 = scalar_select %p630, %s31, 1
        %s632 = scalar_lea.vmem %s4, %s631
        %p633 = scmp.lt.s32.totalorder %s31, 1
        %s634 = scalar_select %p633, %s31, 1
        %s635 = scalar_lea.vmem %s6, %s634
        %p636 = scmp.lt.s32.totalorder %s31, 1
        %s637 = scalar_select %p636, %s31, 1
        %s638 = smul.addr %s637, 8
        %s639 = smul.addr %s638, 4
        %s640 = scalar_lea.vmem %s7, %s639
        %p641 = scmp.lt.s32.totalorder %s31, 1
        %s642 = scalar_select %p641, %s31, 1
        %s643 = scalar_lea.vmem %s8, %s642
        %p644 = scmp.lt.s32.totalorder %s31, 1
        %s645 = scalar_select %p644, %s31, 1
        %s646 = scalar_lea.vmem %s9, %s645
        %p647 = scmp.lt.s32.totalorder %s31, 1
        %s648 = scalar_select %p647, %s31, 1
        %s649 = scalar_lea.vmem %s10, %s648
        %p650 = scmp.lt.s32.totalorder %s31, 1
        %s651 = scalar_select %p650, %s31, 1
        %s652 = scalar_lea.vmem %s11, %s651
        %p653 = scmp.lt.s32.totalorder %s31, 1
        %s654 = scalar_select %p653, %s31, 1
        %s655 = scalar_lea.vmem %s12, %s654
        %p657 = scmp.eq.s32.totalorder %s31, 0
        // Predicated region
        $region85: #{mha_block_forward.1} parent=71 // pred_check
          %p658 = pneg %p657
        $region86: #{mha_block_forward.1} parent=71 // pred_check_branch
          %660 = sbr.rel (%p658) target = $region88
        $region87: #{mha_block_forward.1} parent=71 // pred_region
          %v661 = vld [vmem:[%s0] sm:$0xff]
          %vm662 = vcmask 261120
          %663 = vst.msk [vmem:[#allocation2] sm:$0xff] %vm662, %v661
        $region88: #{mha_block_forward.1} parent=71 // pred_fallthru
          _
        %v664 = vld [vmem:[%s532] sm:$0xf]
        %v665 = vld [vmem:[%s532 + $0x4] sm:$0xf]
        %v666 = vld [vmem:[%s532 + $0x8] sm:$0xf]
        %v667 = vld [vmem:[%s532 + $0xc] sm:$0xf]
        %v668 = vld [vmem:[%s629] sm:$0x1]
        %v669 = vld [vmem:[#allocation2] sm:$0xff]
        %v670 = vpack.c.bf16 %v669, %v669
        %v672 = vlaneseq
        %v673 = vshrl.u32 %v672, 7
        %v674 = vsub.s32 0, %v673
        %v675 = vrot.slane %v668, %v674
        %v681 = vunpack.c.l.b16 %v664
        %v682 = vunpack.c.l.b16 %v665
        %v683 = vunpack.c.l.b16 %v666
        %v684 = vunpack.c.l.b16 %v667
        %v685 = vpack.c.b16 %v682, %v681
        %v686 = vpack.c.b16 %v684, %v683
        %vm689 = vcmask 261120
        %v691 = vsel %vm689, %v670, 0
        %693 = vmatprep.subr.bf16.mxu0 0
        %694 = vmatpush1.bf16.msra.mxu0 %v685
        %695 = vmatprep.subr.bf16.mxu0 0
        %696 = vmatpush1.bf16.msra.mxu0 %v686
        %697 = vmatprep.subr.bf16.mxu0 0
        %698 = vmatpush1.bf16.msra.mxu0 0
        %699 = vmatprep.subr.bf16.mxu0 0
        %700 = vmatpush1.bf16.msra.mxu0 0
        %701 = vmatprep.subr.bf16.mxu0 0
        %702 = vmatpush1.bf16.msra.mxu0 0
        %703 = vmatprep.subr.bf16.mxu0 0
        %704 = vmatpush1.bf16.msra.mxu0 0
        %705 = vmatprep.subr.bf16.mxu0 0
        %706 = vmatpush1.bf16.msra.mxu0 0
        %707 = vmatprep.subr.bf16.mxu0 0
        %708 = vmatpush1.bf16.msra.mxu0 0
        %709 = vmatprep.subr.bf16.mxu0 0
        %710 = vmatpush1.bf16.msra.mxu0 0
        %711 = vmatprep.subr.bf16.mxu0 0
        %712 = vmatpush1.bf16.msra.mxu0 0
        %713 = vmatprep.subr.bf16.mxu0 0
        %714 = vmatpush1.bf16.msra.mxu0 0
        %715 = vmatprep.subr.bf16.mxu0 0
        %716 = vmatpush1.bf16.msra.mxu0 0
        %717 = vmatprep.subr.bf16.mxu0 0
        %718 = vmatpush1.bf16.msra.mxu0 0
        %719 = vmatprep.subr.bf16.mxu0 0
        %720 = vmatpush1.bf16.msra.mxu0 0
        %721 = vmatprep.subr.bf16.mxu0 0
        %722 = vmatpush1.bf16.msra.mxu0 0
        %723 = vmatprep.subr.bf16.mxu0 0
        %724 = vmatpush1.bf16.msra.mxu0 0
        %725 = vmatprep.mubr.bf16.mxu0 0
        %726 = vmatmul.mubr.bf16.gmra.mrb[0].mxu0 %v691
        %v727 = vpop.f32.mrb[0].mxu0
        %v728 = vadd.f32 %v675, %v727
        %v729 = vpop.f32.mrb[0].mxu0
        %v730 = vpop.f32.mrb[0].mxu0
        %v731 = vpop.f32.mrb[0].mxu0
        %732 = vdwg.mxu0
        %v733 = vlaneseq
        %v734 = vand.u32 %v733, 127
        %vm735 = vcmp.lt.s32.totalorder %v734, 6
        %v736 = vsel %vm735, 0.0, -1e+30
        %v737 = vld [vmem:[%s541] sm:$0xf]
        %v738 = vld [vmem:[%s541 + $0x4] sm:$0xf]
        %v739 = vld [vmem:[%s541 + $0x8] sm:$0xf]
        %v740 = vld [vmem:[%s541 + $0xc] sm:$0xf]
        %v741 = vpack.c.bf16 %v728, %v728
        %743 = vrot.lane.b32.xlu0 %v741, 96
        %v744 = vpop.permute.xlu0 %743
        %vm745 = vcmask 64512
        %v747 = vsel %vm745, %v741, 0
        %v750 = vsel %vm745, %v744, 0
        %752 = vmatprep.subr.bf16.mxu0 0
        %753 = vmatpush1.bf16.xpose.msra.mxu0 %v750
        %754 = vmatprep.subr.bf16.mxu0 0
        %755 = vmatpush1.bf16.xpose.msra.mxu0 0
        %756 = vmatprep.subr.bf16.mxu0 0
        %757 = vmatpush1.bf16.xpose.msra.mxu0 0
        %758 = vmatprep.subr.bf16.mxu0 0
        %759 = vmatpush1.bf16.xpose.msra.mxu0 0
        %760 = vmatprep.subr.bf16.mxu0 0
        %761 = vmatpush1.bf16.xpose.msra.mxu0 0
        %762 = vmatprep.subr.bf16.mxu0 0
        %763 = vmatpush1.bf16.xpose.msra.mxu0 0
        %764 = vmatprep.subr.bf16.mxu0 0
        %765 = vmatpush1.bf16.xpose.msra.mxu0 0
        %766 = vmatprep.subr.bf16.mxu0 0
        %767 = vmatpush1.bf16.xpose.msra.mxu0 0
        %768 = vmatprep.subr.bf16.mxu0 0
        %769 = vmatpush1.bf16.xpose.msra.mxu0 0
        %770 = vmatprep.subr.bf16.mxu0 0
        %771 = vmatpush1.bf16.xpose.msra.mxu0 0
        %772 = vmatprep.subr.bf16.mxu0 0
        %773 = vmatpush1.bf16.xpose.msra.mxu0 0
        %774 = vmatprep.subr.bf16.mxu0 0
        %775 = vmatpush1.bf16.xpose.msra.mxu0 0
        %776 = vmatprep.subr.bf16.mxu0 0
        %777 = vmatpush1.bf16.xpose.msra.mxu0 0
        %778 = vmatprep.subr.bf16.mxu0 0
        %779 = vmatpush1.bf16.xpose.msra.mxu0 0
        %780 = vmatprep.subr.bf16.mxu0 0
        %781 = vmatpush1.bf16.xpose.msra.mxu0 0
        %782 = vmatprep.subr.bf16.mxu0 0
        %783 = vmatpush1.bf16.xpose.msra.mxu0 0
        %784 = vmatprep.mubr.bf16.mxu0 0
        %785 = vmatmul.mubr.bf16.gmra.mrb[0].mxu0 %v747
        %v786 = vpop.f32.mrb[0].mxu0
        %v787 = vadd.f32 0.0, %v786
        %v788 = vpop.f32.mrb[0].mxu0
        %v789 = vpop.f32.mrb[0].mxu0
        %v790 = vpop.f32.mrb[0].mxu0
        %791 = vdwg.mxu0
        %v792 = vmul.f32 %v787, 0.35355338
        %v793 = vadd.f32 %v792, %v736
        %v794 = vsel %vm745, %v793, -inf
        %795 = vmax.xlane.f32.xlu0 %v794
        %v796 = vpop.xlane.xlu0 %795
        %v797 = vsub.f32 %v793, %v796
        %v798 = vmul.f32 %v797, 1.442695
        %v799 = vpow.pop %v798
        %v800 = vsel %vm745, %v799, 0.0
        %801 = vadd.xlane.f32.xlu0 %v800
        %v802 = vpop.xlane.xlu0 %801
        %v803 = vrcp.pop %v802
        %v804 = vmul.f32 %v799, %v803
        %v805 = vpack.c.bf16 %v804, %v804
        %806 = vrot.lane.b32.xlu0 %v741, 64
        %v807 = vpop.permute.xlu0 %806
        %v809 = vsel %vm745, %v805, 0
        %vm811 = vcmask 1043456
        %v813 = vsel %vm811, %v807, 0
        %815 = vmatprep.subr.bf16.mxu0 0
        %816 = vmatpush1.bf16.msra.mxu0 %v813
        %817 = vmatprep.subr.bf16.mxu0 0
        %818 = vmatpush1.bf16.msra.mxu0 0
        %819 = vmatprep.subr.bf16.mxu0 0
        %820 = vmatpush1.bf16.msra.mxu0 0
        %821 = vmatprep.subr.bf16.mxu0 0
        %822 = vmatpush1.bf16.msra.mxu0 0
        %823 = vmatprep.subr.bf16.mxu0 0
        %824 = vmatpush1.bf16.msra.mxu0 0
        %825 = vmatprep.subr.bf16.mxu0 0
        %826 = vmatpush1.bf16.msra.mxu0 0
        %827 = vmatprep.subr.bf16.mxu0 0
        %828 = vmatpush1.bf16.msra.mxu0 0
        %829 = vmatprep.subr.bf16.mxu0 0
        %830 = vmatpush1.bf16.msra.mxu0 0
        %831 = vmatprep.subr.bf16.mxu0 0
        %832 = vmatpush1.bf16.msra.mxu0 0
        %833 = vmatprep.subr.bf16.mxu0 0
        %834 = vmatpush1.bf16.msra.mxu0 0
        %835 = vmatprep.subr.bf16.mxu0 0
        %836 = vmatpush1.bf16.msra.mxu0 0
        %837 = vmatprep.subr.bf16.mxu0 0
        %838 = vmatpush1.bf16.msra.mxu0 0
        %839 = vmatprep.subr.bf16.mxu0 0
        %840 = vmatpush1.bf16.msra.mxu0 0
        %841 = vmatprep.subr.bf16.mxu0 0
        %842 = vmatpush1.bf16.msra.mxu0 0
        %843 = vmatprep.subr.bf16.mxu0 0
        %844 = vmatpush1.bf16.msra.mxu0 0
        %845 = vmatprep.subr.bf16.mxu0 0
        %846 = vmatpush1.bf16.msra.mxu0 0
        %847 = vmatprep.mubr.bf16.mxu0 0
        %848 = vmatmul.mubr.bf16.gmra.mrb[0].mxu0 %v809
        %v849 = vpop.f32.mrb[0].mxu0
        %v850 = vadd.f32 0.0, %v849
        %v851 = vpop.f32.mrb[0].mxu0
        %v852 = vpop.f32.mrb[0].mxu0
        %v853 = vpop.f32.mrb[0].mxu0
        %854 = vdwg.mxu0
        %v855 = vpack.c.bf16 %v850, %v850
        %856 = vrot.lane.b32.xlu0 %v741, 120
        %v857 = vpop.permute.xlu0 %856
        %858 = vrot.lane.b32.xlu0 %v741, 88
        %v859 = vpop.permute.xlu0 %858
        %v861 = vsel %vm745, %v857, 0
        %v864 = vsel %vm745, %v859, 0
        %866 = vmatprep.subr.bf16.mxu0 0
        %867 = vmatpush1.bf16.xpose.msra.mxu0 %v864
        %868 = vmatprep.subr.bf16.mxu0 0
        %869 = vmatpush1.bf16.xpose.msra.mxu0 0
        %870 = vmatprep.subr.bf16.mxu0 0
        %871 = vmatpush1.bf16.xpose.msra.mxu0 0
        %872 = vmatprep.subr.bf16.mxu0 0
        %873 = vmatpush1.bf16.xpose.msra.mxu0 0
        %874 = vmatprep.subr.bf16.mxu0 0
        %875 = vmatpush1.bf16.xpose.msra.mxu0 0
        %876 = vmatprep.subr.bf16.mxu0 0
        %877 = vmatpush1.bf16.xpose.msra.mxu0 0
        %878 = vmatprep.subr.bf16.mxu0 0
        %879 = vmatpush1.bf16.xpose.msra.mxu0 0
        %880 = vmatprep.subr.bf16.mxu0 0
        %881 = vmatpush1.bf16.xpose.msra.mxu0 0
        %882 = vmatprep.subr.bf16.mxu0 0
        %883 = vmatpush1.bf16.xpose.msra.mxu0 0
        %884 = vmatprep.subr.bf16.mxu0 0
        %885 = vmatpush1.bf16.xpose.msra.mxu0 0
        %886 = vmatprep.subr.bf16.mxu0 0
        %887 = vmatpush1.bf16.xpose.msra.mxu0 0
        %888 = vmatprep.subr.bf16.mxu0 0
        %889 = vmatpush1.bf16.xpose.msra.mxu0 0
        %890 = vmatprep.subr.bf16.mxu0 0
        %891 = vmatpush1.bf16.xpose.msra.mxu0 0
        %892 = vmatprep.subr.bf16.mxu0 0
        %893 = vmatpush1.bf16.xpose.msra.mxu0 0
        %894 = vmatprep.subr.bf16.mxu0 0
        %895 = vmatpush1.bf16.xpose.msra.mxu0 0
        %896 = vmatprep.subr.bf16.mxu0 0
        %897 = vmatpush1.bf16.xpose.msra.mxu0 0
        %898 = vmatprep.mubr.bf16.mxu0 0
        %899 = vmatmul.mubr.bf16.gmra.mrb[0].mxu0 %v861
        %v900 = vpop.f32.mrb[0].mxu0
        %v901 = vadd.f32 0.0, %v900
        %v902 = vpop.f32.mrb[0].mxu0
        %v903 = vpop.f32.mrb[0].mxu0
        %v904 = vpop.f32.mrb[0].mxu0
        %905 = vdwg.mxu0
        %v906 = vmul.f32 %v901, 0.35355338
        %v907 = vadd.f32 %v906, %v736
        %v908 = vsel %vm745, %v907, -inf
        %909 = vmax.xlane.f32.xlu0 %v908
        %v910 = vpop.xlane.xlu0 %909
        %v911 = vsub.f32 %v907, %v910
        %v912 = vmul.f32 %v911, 1.442695
        %v913 = vpow.pop %v912
        %v914 = vsel %vm745, %v913, 0.0
        %915 = vadd.xlane.f32.xlu0 %v914
        %v916 = vpop.xlane.xlu0 %915
        %v917 = vrcp.pop %v916
        %v918 = vmul.f32 %v913, %v917
        %v919 = vpack.c.bf16 %v918, %v918
        %920 = vrot.lane.b32.xlu0 %v741, 56
        %v921 = vpop.permute.xlu0 %920
        %v923 = vsel %vm745, %v919, 0
        %v926 = vsel %vm811, %v921, 0
        %928 = vmatprep.subr.bf16.mxu0 0
        %929 = vmatpush1.bf16.msra.mxu0 %v926
        %930 = vmatprep.subr.bf16.mxu0 0
        %931 = vmatpush1.bf16.msra.mxu0 0
        %932 = vmatprep.subr.bf16.mxu0 0
        %933 = vmatpush1.bf16.msra.mxu0 0
        %934 = vmatprep.subr.bf16.mxu0 0
        %935 = vmatpush1.bf16.msra.mxu0 0
        %936 = vmatprep.subr.bf16.mxu0 0
        %937 = vmatpush1.bf16.msra.mxu0 0
        %938 = vmatprep.subr.bf16.mxu0 0
        %939 = vmatpush1.bf16.msra.mxu0 0
        %940 = vmatprep.subr.bf16.mxu0 0
        %941 = vmatpush1.bf16.msra.mxu0 0
        %942 = vmatprep.subr.bf16.mxu0 0
        %943 = vmatpush1.bf16.msra.mxu0 0
        %944 = vmatprep.subr.bf16.mxu0 0
        %945 = vmatpush1.bf16.msra.mxu0 0
        %946 = vmatprep.subr.bf16.mxu0 0
        %947 = vmatpush1.bf16.msra.mxu0 0
        %948 = vmatprep.subr.bf16.mxu0 0
        %949 = vmatpush1.bf16.msra.mxu0 0
        %950 = vmatprep.subr.bf16.mxu0 0
        %951 = vmatpush1.bf16.msra.mxu0 0
        %952 = vmatprep.subr.bf16.mxu0 0
        %953 = vmatpush1.bf16.msra.mxu0 0
        %954 = vmatprep.subr.bf16.mxu0 0
        %955 = vmatpush1.bf16.msra.mxu0 0
        %956 = vmatprep.subr.bf16.mxu0 0
        %957 = vmatpush1.bf16.msra.mxu0 0
        %958 = vmatprep.subr.bf16.mxu0 0
        %959 = vmatpush1.bf16.msra.mxu0 0
        %960 = vmatprep.mubr.bf16.mxu0 0
        %961 = vmatmul.mubr.bf16.gmra.mrb[0].mxu0 %v923
        %v962 = vpop.f32.mrb[0].mxu0
        %v963 = vadd.f32 0.0, %v962
        %v964 = vpop.f32.mrb[0].mxu0
        %v965 = vpop.f32.mrb[0].mxu0
        %v966 = vpop.f32.mrb[0].mxu0
        %967 = vdwg.mxu0
        %v968 = vpack.c.bf16 %v963, %v963
        %v970 = vsel %vm745, %v968, 0
        %v973 = vsel %vm811, %v738, 0
        %975 = vmatprep.subr.bf16.mxu0 0
        %976 = vmatpush1.bf16.msra.mxu0 %v973
        %977 = vmatprep.subr.bf16.mxu0 0
        %978 = vmatpush1.bf16.msra.mxu0 0
        %979 = vmatprep.subr.bf16.mxu0 0
        %980 = vmatpush1.bf16.msra.mxu0 0
        %981 = vmatprep.subr.bf16.mxu0 0
        %982 = vmatpush1.bf16.msra.mxu0 0
        %983 = vmatprep.subr.bf16.mxu0 0
        %984 = vmatpush1.bf16.msra.mxu0 0
        %985 = vmatprep.subr.bf16.mxu0 0
        %986 = vmatpush1.bf16.msra.mxu0 0
        %987 = vmatprep.subr.bf16.mxu0 0
        %988 = vmatpush1.bf16.msra.mxu0 0
        %989 = vmatprep.subr.bf16.mxu0 0
        %990 = vmatpush1.bf16.msra.mxu0 0
        %991 = vmatprep.subr.bf16.mxu0 0
        %992 = vmatpush1.bf16.msra.mxu0 0
        %993 = vmatprep.subr.bf16.mxu0 0
        %994 = vmatpush1.bf16.msra.mxu0 0
        %995 = vmatprep.subr.bf16.mxu0 0
        %996 = vmatpush1.bf16.msra.mxu0 0
        %997 = vmatprep.subr.bf16.mxu0 0
        %998 = vmatpush1.bf16.msra.mxu0 0
        %999 = vmatprep.subr.bf16.mxu0 0
        %1000 = vmatpush1.bf16.msra.mxu0 0
        %1001 = vmatprep.subr.bf16.mxu0 0
        %1002 = vmatpush1.bf16.msra.mxu0 0
        %1003 = vmatprep.subr.bf16.mxu0 0
        %1004 = vmatpush1.bf16.msra.mxu0 0
        %1005 = vmatprep.subr.bf16.mxu0 0
        %1006 = vmatpush1.bf16.msra.mxu0 0
        %1007 = vmatprep.mubr.bf16.mxu0 0
        %1008 = vmatmul.mubr.bf16.gmra.mrb[0].mxu0 %v970
        %v1009 = vpop.f32.mrb[0].mxu0
        %v1010 = vadd.f32 0.0, %v1009
        %v1011 = vpop.f32.mrb[0].mxu0
        %v1012 = vpop.f32.mrb[0].mxu0
        %v1013 = vpop.f32.mrb[0].mxu0
        %1014 = vdwg.mxu0
        %v1016 = vsel %vm745, %v855, 0
        %v1019 = vsel %vm811, %v737, 0
        %1021 = vmatprep.subr.bf16.mxu0 0
        %1022 = vmatpush1.bf16.msra.mxu0 %v1019
        %1023 = vmatprep.subr.bf16.mxu0 0
        %1024 = vmatpush1.bf16.msra.mxu0 0
        %1025 = vmatprep.subr.bf16.mxu0 0
        %1026 = vmatpush1.bf16.msra.mxu0 0
        %1027 = vmatprep.subr.bf16.mxu0 0
        %1028 = vmatpush1.bf16.msra.mxu0 0
        %1029 = vmatprep.subr.bf16.mxu0 0
        %1030 = vmatpush1.bf16.msra.mxu0 0
        %1031 = vmatprep.subr.bf16.mxu0 0
        %1032 = vmatpush1.bf16.msra.mxu0 0
        %1033 = vmatprep.subr.bf16.mxu0 0
        %1034 = vmatpush1.bf16.msra.mxu0 0
        %1035 = vmatprep.subr.bf16.mxu0 0
        %1036 = vmatpush1.bf16.msra.mxu0 0
        %1037 = vmatprep.subr.bf16.mxu0 0
        %1038 = vmatpush1.bf16.msra.mxu0 0
        %1039 = vmatprep.subr.bf16.mxu0 0
        %1040 = vmatpush1.bf16.msra.mxu0 0
        %1041 = vmatprep.subr.bf16.mxu0 0
        %1042 = vmatpush1.bf16.msra.mxu0 0
        %1043 = vmatprep.subr.bf16.mxu0 0
        %1044 = vmatpush1.bf16.msra.mxu0 0
        %1045 = vmatprep.subr.bf16.mxu0 0
        %1046 = vmatpush1.bf16.msra.mxu0 0
        %1047 = vmatprep.subr.bf16.mxu0 0
        %1048 = vmatpush1.bf16.msra.mxu0 0
        %1049 = vmatprep.subr.bf16.mxu0 0
        %1050 = vmatpush1.bf16.msra.mxu0 0
        %1051 = vmatprep.subr.bf16.mxu0 0
        %1052 = vmatpush1.bf16.msra.mxu0 0
        %1053 = vmatprep.mubr.bf16.mxu0 0
        %1054 = vmatmul.mubr.bf16.gmra.mrb[0].mxu0 %v1016
        %v1055 = vpop.f32.mrb[0].mxu0
        %v1056 = vadd.f32 %v1010, %v1055
        %v1057 = vpop.f32.mrb[0].mxu0
        %v1058 = vpop.f32.mrb[0].mxu0
        %v1059 = vpop.f32.mrb[0].mxu0
        %1060 = vdwg.mxu0
        %1061 = vrot.lane.b32.xlu0 %v741, 112
        %v1062 = vpop.permute.xlu0 %1061
        %1063 = vrot.lane.b32.xlu0 %v741, 80
        %v1064 = vpop.permute.xlu0 %1063
        %v1066 = vsel %vm745, %v1062, 0
        %v1069 = vsel %vm745, %v1064, 0
        %1071 = vmatprep.subr.bf16.mxu0 0
        %1072 = vmatpush1.bf16.xpose.msra.mxu0 %v1069
        %1073 = vmatprep.subr.bf16.mxu0 0
        %1074 = vmatpush1.bf16.xpose.msra.mxu0 0
        %1075 = vmatprep.subr.bf16.mxu0 0
        %1076 = vmatpush1.bf16.xpose.msra.mxu0 0
        %1077 = vmatprep.subr.bf16.mxu0 0
        %1078 = vmatpush1.bf16.xpose.msra.mxu0 0
        %1079 = vmatprep.subr.bf16.mxu0 0
        %1080 = vmatpush1.bf16.xpose.msra.mxu0 0
        %1081 = vmatprep.subr.bf16.mxu0 0
        %1082 = vmatpush1.bf16.xpose.msra.mxu0 0
        %1083 = vmatprep.subr.bf16.mxu0 0
        %1084 = vmatpush1.bf16.xpose.msra.mxu0 0
        %1085 = vmatprep.subr.bf16.mxu0 0
        %1086 = vmatpush1.bf16.xpose.msra.mxu0 0
        %1087 = vmatprep.subr.bf16.mxu0 0
        %1088 = vmatpush1.bf16.xpose.msra.mxu0 0
        %1089 = vmatprep.subr.bf16.mxu0 0
        %1090 = vmatpush1.bf16.xpose.msra.mxu0 0
        %1091 = vmatprep.subr.bf16.mxu0 0
        %1092 = vmatpush1.bf16.xpose.msra.mxu0 0
        %1093 = vmatprep.subr.bf16.mxu0 0
        %1094 = vmatpush1.bf16.xpose.msra.mxu0 0
        %1095 = vmatprep.subr.bf16.mxu0 0
        %1096 = vmatpush1.bf16.xpose.msra.mxu0 0
        %1097 = vmatprep.subr.bf16.mxu0 0
        %1098 = vmatpush1.bf16.xpose.msra.mxu0 0
        %1099 = vmatprep.subr.bf16.mxu0 0
        %1100 = vmatpush1.bf16.xpose.msra.mxu0 0
        %1101 = vmatprep.subr.bf16.mxu0 0
        %1102 = vmatpush1.bf16.xpose.msra.mxu0 0
        %1103 = vmatprep.mubr.bf16.mxu0 0
        %1104 = vmatmul.mubr.bf16.gmra.mrb[0].mxu0 %v1066
        %v1105 = vpop.f32.mrb[0].mxu0
        %v1106 = vadd.f32 0.0, %v1105
        %v1107 = vpop.f32.mrb[0].mxu0
        %v1108 = vpop.f32.mrb[0].mxu0
        %v1109 = vpop.f32.mrb[0].mxu0
        %1110 = vdwg.mxu0
        %v1111 = vmul.f32 %v1106, 0.35355338
        %v1112 = vadd.f32 %v1111, %v736
        %v1113 = vsel %vm745, %v1112, -inf
        %1114 = vmax.xlane.f32.xlu0 %v1113
        %v1115 = vpop.xlane.xlu0 %1114
        %v1116 = vsub.f32 %v1112, %v1115
        %v1117 = vmul.f32 %v1116, 1.442695
        %v1118 = vpow.pop %v1117
        %v1119 = vsel %vm745, %v1118, 0.0
        %1120 = vadd.xlane.f32.xlu0 %v1119
        %v1121 = vpop.xlane.xlu0 %1120
        %v1122 = vrcp.pop %v1121
        %v1123 = vmul.f32 %v1118, %v1122
        %v1124 = vpack.c.bf16 %v1123, %v1123
        %1125 = vrot.lane.b32.xlu0 %v741, 48
        %v1126 = vpop.permute.xlu0 %1125
        %v1128 = vsel %vm745, %v1124, 0
        %v1131 = vsel %vm811, %v1126, 0
        %1133 = vmatprep.subr.bf16.mxu0 0
        %1134 = vmatpush1.bf16.msra.mxu0 %v1131
        %1135 = vmatprep.subr.bf16.mxu0 0
        %1136 = vmatpush1.bf16.msra.mxu0 0
        %1137 = vmatprep.subr.bf16.mxu0 0
        %1138 = vmatpush1.bf16.msra.mxu0 0
        %1139 = vmatprep.subr.bf16.mxu0 0
        %1140 = vmatpush1.bf16.msra.mxu0 0
        %1141 = vmatprep.subr.bf16.mxu0 0
        %1142 = vmatpush1.bf16.msra.mxu0 0
        %1143 = vmatprep.subr.bf16.mxu0 0
        %1144 = vmatpush1.bf16.msra.mxu0 0
        %1145 = vmatprep.subr.bf16.mxu0 0
        %1146 = vmatpush1.bf16.msra.mxu0 0
        %1147 = vmatprep.subr.bf16.mxu0 0
        %1148 = vmatpush1.bf16.msra.mxu0 0
        %1149 = vmatprep.subr.bf16.mxu0 0
        %1150 = vmatpush1.bf16.msra.mxu0 0
        %1151 = vmatprep.subr.bf16.mxu0 0
        %1152 = vmatpush1.bf16.msra.mxu0 0
        %1153 = vmatprep.subr.bf16.mxu0 0
        %1154 = vmatpush1.bf16.msra.mxu0 0
        %1155 = vmatprep.subr.bf16.mxu0 0
        %1156 = vmatpush1.bf16.msra.mxu0 0
        %1157 = vmatprep.subr.bf16.mxu0 0
        %1158 = vmatpush1.bf16.msra.mxu0 0
        %1159 = vmatprep.subr.bf16.mxu0 0
        %1160 = vmatpush1.bf16.msra.mxu0 0
        %1161 = vmatprep.subr.bf16.mxu0 0
        %1162 = vmatpush1.bf16.msra.mxu0 0
        %1163 = vmatprep.subr.bf16.mxu0 0
        %1164 = vmatpush1.bf16.msra.mxu0 0
        %1165 = vmatprep.mubr.bf16.mxu0 0
        %1166 = vmatmul.mubr.bf16.gmra.mrb[0].mxu0 %v1128
        %v1167 = vpop.f32.mrb[0].mxu0
        %v1168 = vadd.f32 0.0, %v1167
        %v1169 = vpop.f32.mrb[0].mxu0
        %v1170 = vpop.f32.mrb[0].mxu0
        %v1171 = vpop.f32.mrb[0].mxu0
        %1172 = vdwg.mxu0
        %v1173 = vpack.c.bf16 %v1168, %v1168
        %v1175 = vsel %vm745, %v1173, 0
        %v1178 = vsel %vm811, %v739, 0
        %1180 = vmatprep.subr.bf16.mxu0 0
        %1181 = vmatpush1.bf16.msra.mxu0 %v1178
        %1182 = vmatprep.subr.bf16.mxu0 0
        %1183 = vmatpush1.bf16.msra.mxu0 0
        %1184 = vmatprep.subr.bf16.mxu0 0
        %1185 = vmatpush1.bf16.msra.mxu0 0
        %1186 = vmatprep.subr.bf16.mxu0 0
        %1187 = vmatpush1.bf16.msra.mxu0 0
        %1188 = vmatprep.subr.bf16.mxu0 0
        %1189 = vmatpush1.bf16.msra.mxu0 0
        %1190 = vmatprep.subr.bf16.mxu0 0
        %1191 = vmatpush1.bf16.msra.mxu0 0
        %1192 = vmatprep.subr.bf16.mxu0 0
        %1193 = vmatpush1.bf16.msra.mxu0 0
        %1194 = vmatprep.subr.bf16.mxu0 0
        %1195 = vmatpush1.bf16.msra.mxu0 0
        %1196 = vmatprep.subr.bf16.mxu0 0
        %1197 = vmatpush1.bf16.msra.mxu0 0
        %1198 = vmatprep.subr.bf16.mxu0 0
        %1199 = vmatpush1.bf16.msra.mxu0 0
        %1200 = vmatprep.subr.bf16.mxu0 0
        %1201 = vmatpush1.bf16.msra.mxu0 0
        %1202 = vmatprep.subr.bf16.mxu0 0
        %1203 = vmatpush1.bf16.msra.mxu0 0
        %1204 = vmatprep.subr.bf16.mxu0 0
        %1205 = vmatpush1.bf16.msra.mxu0 0
        %1206 = vmatprep.subr.bf16.mxu0 0
        %1207 = vmatpush1.bf16.msra.mxu0 0
        %1208 = vmatprep.subr.bf16.mxu0 0
        %1209 = vmatpush1.bf16.msra.mxu0 0
        %1210 = vmatprep.subr.bf16.mxu0 0
        %1211 = vmatpush1.bf16.msra.mxu0 0
        %1212 = vmatprep.mubr.bf16.mxu0 0
        %1213 = vmatmul.mubr.bf16.gmra.mrb[0].mxu0 %v1175
        %v1214 = vpop.f32.mrb[0].mxu0
        %v1215 = vadd.f32 0.0, %v1214
        %v1216 = vpop.f32.mrb[0].mxu0
        %v1217 = vpop.f32.mrb[0].mxu0
        %v1218 = vpop.f32.mrb[0].mxu0
        %1219 = vdwg.mxu0
        %v1220 = vadd.f32 %v1056, %v1215
        %1221 = vrot.lane.b32.xlu0 %v741, 104
        %v1222 = vpop.permute.xlu0 %1221
        %1223 = vrot.lane.b32.xlu0 %v741, 72
        %v1224 = vpop.permute.xlu0 %1223
        %v1226 = vsel %vm745, %v1222, 0
        %v1229 = vsel %vm745, %v1224, 0
        %1231 = vmatprep.subr.bf16.mxu0 0
        %1232 = vmatpush1.bf16.xpose.msra.mxu0 %v1229
        %1233 = vmatprep.subr.bf16.mxu0 0
        %1234 = vmatpush1.bf16.xpose.msra.mxu0 0
        %1235 = vmatprep.subr.bf16.mxu0 0
        %1236 = vmatpush1.bf16.xpose.msra.mxu0 0
        %1237 = vmatprep.subr.bf16.mxu0 0
        %1238 = vmatpush1.bf16.xpose.msra.mxu0 0
        %1239 = vmatprep.subr.bf16.mxu0 0
        %1240 = vmatpush1.bf16.xpose.msra.mxu0 0
        %1241 = vmatprep.subr.bf16.mxu0 0
        %1242 = vmatpush1.bf16.xpose.msra.mxu0 0
        %1243 = vmatprep.subr.bf16.mxu0 0
        %1244 = vmatpush1.bf16.xpose.msra.mxu0 0
        %1245 = vmatprep.subr.bf16.mxu0 0
        %1246 = vmatpush1.bf16.xpose.msra.mxu0 0
        %1247 = vmatprep.subr.bf16.mxu0 0
        %1248 = vmatpush1.bf16.xpose.msra.mxu0 0
        %1249 = vmatprep.subr.bf16.mxu0 0
        %1250 = vmatpush1.bf16.xpose.msra.mxu0 0
        %1251 = vmatprep.subr.bf16.mxu0 0
        %1252 = vmatpush1.bf16.xpose.msra.mxu0 0
        %1253 = vmatprep.subr.bf16.mxu0 0
        %1254 = vmatpush1.bf16.xpose.msra.mxu0 0
        %1255 = vmatprep.subr.bf16.mxu0 0
        %1256 = vmatpush1.bf16.xpose.msra.mxu0 0
        %1257 = vmatprep.subr.bf16.mxu0 0
        %1258 = vmatpush1.bf16.xpose.msra.mxu0 0
        %1259 = vmatprep.subr.bf16.mxu0 0
        %1260 = vmatpush1.bf16.xpose.msra.mxu0 0
        %1261 = vmatprep.subr.bf16.mxu0 0
        %1262 = vmatpush1.bf16.xpose.msra.mxu0 0
        %1263 = vmatprep.mubr.bf16.mxu0 0
        %1264 = vmatmul.mubr.bf16.gmra.mrb[0].mxu0 %v1226
        %v1265 = vpop.f32.mrb[0].mxu0
        %v1266 = vadd.f32 0.0, %v1265
        %v1267 = vpop.f32.mrb[0].mxu0
        %v1268 = vpop.f32.mrb[0].mxu0
        %v1269 = vpop.f32.mrb[0].mxu0
        %1270 = vdwg.mxu0
        %v1271 = vmul.f32 %v1266, 0.35355338
        %v1272 = vadd.f32 %v1271, %v736
        %v1273 = vsel %vm745, %v1272, -inf
        %1274 = vmax.xlane.f32.xlu0 %v1273
        %v1275 = vpop.xlane.xlu0 %1274
        %v1276 = vsub.f32 %v1272, %v1275
        %v1277 = vmul.f32 %v1276, 1.442695
        %v1278 = vpow.pop %v1277
        %v1279 = vsel %vm745, %v1278, 0.0
        %1280 = vadd.xlane.f32.xlu0 %v1279
        %v1281 = vpop.xlane.xlu0 %1280
        %v1282 = vrcp.pop %v1281
        %v1283 = vmul.f32 %v1278, %v1282
        %v1284 = vpack.c.bf16 %v1283, %v1283
        %1285 = vrot.lane.b32.xlu0 %v741, 40
        %v1286 = vpop.permute.xlu0 %1285
        %v1288 = vsel %vm745, %v1284, 0
        %v1291 = vsel %vm811, %v1286, 0
        %1293 = vmatprep.subr.bf16.mxu0 0
        %1294 = vmatpush1.bf16.msra.mxu0 %v1291
        %1295 = vmatprep.subr.bf16.mxu0 0
        %1296 = vmatpush1.bf16.msra.mxu0 0
        %1297 = vmatprep.subr.bf16.mxu0 0
        %1298 = vmatpush1.bf16.msra.mxu0 0
        %1299 = vmatprep.subr.bf16.mxu0 0
        %1300 = vmatpush1.bf16.msra.mxu0 0
        %1301 = vmatprep.subr.bf16.mxu0 0
        %1302 = vmatpush1.bf16.msra.mxu0 0
        %1303 = vmatprep.subr.bf16.mxu0 0
        %1304 = vmatpush1.bf16.msra.mxu0 0
        %1305 = vmatprep.subr.bf16.mxu0 0
        %1306 = vmatpush1.bf16.msra.mxu0 0
        %1307 = vmatprep.subr.bf16.mxu0 0
        %1308 = vmatpush1.bf16.msra.mxu0 0
        %1309 = vmatprep.subr.bf16.mxu0 0
        %1310 = vmatpush1.bf16.msra.mxu0 0
        %1311 = vmatprep.subr.bf16.mxu0 0
        %1312 = vmatpush1.bf16.msra.mxu0 0
        %1313 = vmatprep.subr.bf16.mxu0 0
        %1314 = vmatpush1.bf16.msra.mxu0 0
        %1315 = vmatprep.subr.bf16.mxu0 0
        %1316 = vmatpush1.bf16.msra.mxu0 0
        %1317 = vmatprep.subr.bf16.mxu0 0
        %1318 = vmatpush1.bf16.msra.mxu0 0
        %1319 = vmatprep.subr.bf16.mxu0 0
        %1320 = vmatpush1.bf16.msra.mxu0 0
        %1321 = vmatprep.subr.bf16.mxu0 0
        %1322 = vmatpush1.bf16.msra.mxu0 0
        %1323 = vmatprep.subr.bf16.mxu0 0
        %1324 = vmatpush1.bf16.msra.mxu0 0
        %1325 = vmatprep.mubr.bf16.mxu0 0
        %1326 = vmatmul.mubr.bf16.gmra.mrb[0].mxu0 %v1288
        %v1327 = vpop.f32.mrb[0].mxu0
        %v1328 = vadd.f32 0.0, %v1327
        %v1329 = vpop.f32.mrb[0].mxu0
        %v1330 = vpop.f32.mrb[0].mxu0
        %v1331 = vpop.f32.mrb[0].mxu0
        %1332 = vdwg.mxu0
        %v1333 = vpack.c.bf16 %v1328, %v1328
        %v1335 = vsel %vm745, %v1333, 0
        %v1338 = vsel %vm811, %v740, 0
        %1340 = vmatprep.subr.bf16.mxu0 0
        %1341 = vmatpush1.bf16.msra.mxu0 %v1338
        %1342 = vmatprep.subr.bf16.mxu0 0
        %1343 = vmatpush1.bf16.msra.mxu0 0
        %1344 = vmatprep.subr.bf16.mxu0 0
        %1345 = vmatpush1.bf16.msra.mxu0 0
        %1346 = vmatprep.subr.bf16.mxu0 0
        %1347 = vmatpush1.bf16.msra.mxu0 0
        %1348 = vmatprep.subr.bf16.mxu0 0
        %1349 = vmatpush1.bf16.msra.mxu0 0
        %1350 = vmatprep.subr.bf16.mxu0 0
        %1351 = vmatpush1.bf16.msra.mxu0 0
        %1352 = vmatprep.subr.bf16.mxu0 0
        %1353 = vmatpush1.bf16.msra.mxu0 0
        %1354 = vmatprep.subr.bf16.mxu0 0
        %1355 = vmatpush1.bf16.msra.mxu0 0
        %1356 = vmatprep.subr.bf16.mxu0 0
        %1357 = vmatpush1.bf16.msra.mxu0 0
        %1358 = vmatprep.subr.bf16.mxu0 0
        %1359 = vmatpush1.bf16.msra.mxu0 0
        %1360 = vmatprep.subr.bf16.mxu0 0
        %1361 = vmatpush1.bf16.msra.mxu0 0
        %1362 = vmatprep.subr.bf16.mxu0 0
        %1363 = vmatpush1.bf16.msra.mxu0 0
        %1364 = vmatprep.subr.bf16.mxu0 0
        %1365 = vmatpush1.bf16.msra.mxu0 0
        %1366 = vmatprep.subr.bf16.mxu0 0
        %1367 = vmatpush1.bf16.msra.mxu0 0
        %1368 = vmatprep.subr.bf16.mxu0 0
        %1369 = vmatpush1.bf16.msra.mxu0 0
        %1370 = vmatprep.subr.bf16.mxu0 0
        %1371 = vmatpush1.bf16.msra.mxu0 0
        %1372 = vmatprep.mubr.bf16.mxu0 0
        %1373 = vmatmul.mubr.bf16.gmra.mrb[0].mxu0 %v1335
        %v1374 = vpop.f32.mrb[0].mxu0
        %v1375 = vadd.f32 0.0, %v1374
        %v1376 = vpop.f32.mrb[0].mxu0
        %v1377 = vpop.f32.mrb[0].mxu0
        %v1378 = vpop.f32.mrb[0].mxu0
        %1379 = vdwg.mxu0
        %v1380 = vadd.f32 %v1220, %v1375
        %v1381 = vld [vmem:[%s632] sm:$0x1]
        %v1383 = vlaneseq
        %v1384 = vshrl.u32 %v1383, 7
        %v1385 = vsub.s32 0, %v1384
        %v1386 = vrot.slane %v1381, %v1385
        %v1388 = vadd.f32 %v1380, %v1386
        %v1389 = vadd.f32 %v1388, %v669
        %v1390 = vld [vmem:[%s646] sm:$0x1]
        %v1391 = vld [vmem:[%s649] sm:$0x1]
        %v1392 = vsel %vm689, %v1389, 0.0
        %1393 = vadd.xlane.f32.xlu0 %v1392
        %v1394 = vpop.xlane.xlu0 %1393
        %v1395 = vrcp.pop 32.0
        %v1396 = vmul.f32 %v1394, %v1395
        %v1397 = vsub.f32 %v1389, %v1396
        %v1398 = vmul.f32 %v1397, %v1397
        %v1399 = vsel %vm689, %v1398, 0.0
        %1400 = vadd.xlane.f32.xlu0 %v1399
        %v1401 = vpop.xlane.xlu0 %1400
        %v1402 = vmul.f32 %v1401, %v1395
        %v1403 = vadd.f32 %v1402, 1e-05
        %v1404 = vrsqrt.pop %v1403
        %v1405 = vmul.f32 %v1397, %v1404
        %v1407 = vlaneseq
        %v1408 = vshrl.u32 %v1407, 7
        %v1409 = vsub.s32 0, %v1408
        %v1410 = vrot.slane %v1390, %v1409
        %v1412 = vmul.f32 %v1405, %v1410
        %v1414 = vlaneseq
        %v1415 = vshrl.u32 %v1414, 7
        %v1416 = vsub.s32 0, %v1415
        %v1417 = vrot.slane %v1391, %v1416
        %v1419 = vadd.f32 %v1412, %v1417
        %v1420 = vpack.c.bf16 %v1419, %v1419
        %v1421 = vld [vmem:[%s550] sm:$0xf]
        %v1422 = vld [vmem:[%s550 + $0x4] sm:$0xf]
        %v1423 = vld [vmem:[%s550 + $0x8] sm:$0xf]
        %v1424 = vld [vmem:[%s550 + $0xc] sm:$0xf]
        %v1425 = vld [vmem:[%s635] sm:$0x1]
        %v1427 = vlaneseq
        %v1428 = vshrl.u32 %v1427, 7
        %v1429 = vsub.s32 0, %v1428
        %v1430 = vrot.slane %v1425, %v1429
        %v1436 = vunpack.c.l.b16 %v1421
        %v1437 = vunpack.c.l.b16 %v1422
        %v1438 = vunpack.c.l.b16 %v1423
        %v1439 = vunpack.c.l.b16 %v1424
        %v1440 = vpack.c.b16 %v1437, %v1436
        %v1441 = vpack.c.b16 %v1439, %v1438
        %v1445 = vsel %vm689, %v1420, 0
        %1447 = vmatprep.subr.bf16.mxu0 0
        %1448 = vmatpush1.bf16.msra.mxu0 %v1440
        %1449 = vmatprep.subr.bf16.mxu0 0
        %1450 = vmatpush1.bf16.msra.mxu0 %v1441
        %1451 = vmatprep.subr.bf16.mxu0 0
        %1452 = vmatpush1.bf16.msra.mxu0 0
        %1453 = vmatprep.subr.bf16.mxu0 0
        %1454 = vmatpush1.bf16.msra.mxu0 0
        %1455 = vmatprep.subr.bf16.mxu0 0
        %1456 = vmatpush1.bf16.msra.mxu0 0
        %1457 = vmatprep.subr.bf16.mxu0 0
        %1458 = vmatpush1.bf16.msra.mxu0 0
        %1459 = vmatprep.subr.bf16.mxu0 0
        %1460 = vmatpush1.bf16.msra.mxu0 0
        %1461 = vmatprep.subr.bf16.mxu0 0
        %1462 = vmatpush1.bf16.msra.mxu0 0
        %1463 = vmatprep.subr.bf16.mxu0 0
        %1464 = vmatpush1.bf16.msra.mxu0 0
        %1465 = vmatprep.subr.bf16.mxu0 0
        %1466 = vmatpush1.bf16.msra.mxu0 0
        %1467 = vmatprep.subr.bf16.mxu0 0
        %1468 = vmatpush1.bf16.msra.mxu0 0
        %1469 = vmatprep.subr.bf16.mxu0 0
        %1470 = vmatpush1.bf16.msra.mxu0 0
        %1471 = vmatprep.subr.bf16.mxu0 0
        %1472 = vmatpush1.bf16.msra.mxu0 0
        %1473 = vmatprep.subr.bf16.mxu0 0
        %1474 = vmatpush1.bf16.msra.mxu0 0
        %1475 = vmatprep.subr.bf16.mxu0 0
        %1476 = vmatpush1.bf16.msra.mxu0 0
        %1477 = vmatprep.subr.bf16.mxu0 0
        %1478 = vmatpush1.bf16.msra.mxu0 0
        %1479 = vmatprep.mubr.bf16.mxu0 0
        %1480 = vmatmul.mubr.bf16.gmra.mrb[0].mxu0 %v1445
        %v1481 = vpop.f32.mrb[0].mxu0
        %v1482 = vadd.f32 %v1430, %v1481
        %v1483 = vpop.f32.mrb[0].mxu0
        %v1484 = vpop.f32.mrb[0].mxu0
        %v1485 = vpop.f32.mrb[0].mxu0
        %1486 = vdwg.mxu0
        %v1487 = vmax.f32 %v1482, 0.0
        %v1488 = vpack.c.bf16 %v1487, %v1487
        %v1489 = vld [vmem:[%s640] sm:$0xf]
        %v1490 = vld [vmem:[%s640 + $0x4] sm:$0xf]
        %v1491 = vld [vmem:[%s640 + $0x8] sm:$0xf]
        %v1492 = vld [vmem:[%s640 + $0xc] sm:$0xf]
        %v1493 = vld [vmem:[%s640 + $0x10] sm:$0xf]
        %v1494 = vld [vmem:[%s640 + $0x14] sm:$0xf]
        %v1495 = vld [vmem:[%s640 + $0x18] sm:$0xf]
        %v1496 = vld [vmem:[%s640 + $0x1c] sm:$0xf]
        %v1497 = vld [vmem:[%s643] sm:$0x1]
        %v1499 = vlaneseq
        %v1500 = vshrl.u32 %v1499, 7
        %v1501 = vsub.s32 0, %v1500
        %v1502 = vrot.slane %v1497, %v1501
        %v1512 = vunpack.c.l.b16 %v1489
        %v1513 = vunpack.c.l.b16 %v1490
        %v1514 = vunpack.c.l.b16 %v1491
        %v1515 = vunpack.c.l.b16 %v1492
        %v1516 = vunpack.c.l.b16 %v1493
        %v1517 = vunpack.c.l.b16 %v1494
        %v1518 = vunpack.c.l.b16 %v1495
        %v1519 = vunpack.c.l.b16 %v1496
        %v1520 = vpack.c.b16 %v1513, %v1512
        %v1521 = vpack.c.b16 %v1515, %v1514
        %v1522 = vpack.c.b16 %v1517, %v1516
        %v1523 = vpack.c.b16 %v1519, %v1518
        %vm1528 = vcmask 523264
        %v1530 = vsel %vm1528, %v1488, 0
        %1532 = vmatprep.subr.bf16.mxu0 0
        %1533 = vmatpush1.bf16.msra.mxu0 %v1520
        %1534 = vmatprep.subr.bf16.mxu0 0
        %1535 = vmatpush1.bf16.msra.mxu0 %v1521
        %1536 = vmatprep.subr.bf16.mxu0 0
        %1537 = vmatpush1.bf16.msra.mxu0 %v1522
        %1538 = vmatprep.subr.bf16.mxu0 0
        %1539 = vmatpush1.bf16.msra.mxu0 %v1523
        %1540 = vmatprep.subr.bf16.mxu0 0
        %1541 = vmatpush1.bf16.msra.mxu0 0
        %1542 = vmatprep.subr.bf16.mxu0 0
        %1543 = vmatpush1.bf16.msra.mxu0 0
        %1544 = vmatprep.subr.bf16.mxu0 0
        %1545 = vmatpush1.bf16.msra.mxu0 0
        %1546 = vmatprep.subr.bf16.mxu0 0
        %1547 = vmatpush1.bf16.msra.mxu0 0
        %1548 = vmatprep.subr.bf16.mxu0 0
        %1549 = vmatpush1.bf16.msra.mxu0 0
        %1550 = vmatprep.subr.bf16.mxu0 0
        %1551 = vmatpush1.bf16.msra.mxu0 0
        %1552 = vmatprep.subr.bf16.mxu0 0
        %1553 = vmatpush1.bf16.msra.mxu0 0
        %1554 = vmatprep.subr.bf16.mxu0 0
        %1555 = vmatpush1.bf16.msra.mxu0 0
        %1556 = vmatprep.subr.bf16.mxu0 0
        %1557 = vmatpush1.bf16.msra.mxu0 0
        %1558 = vmatprep.subr.bf16.mxu0 0
        %1559 = vmatpush1.bf16.msra.mxu0 0
        %1560 = vmatprep.subr.bf16.mxu0 0
        %1561 = vmatpush1.bf16.msra.mxu0 0
        %1562 = vmatprep.subr.bf16.mxu0 0
        %1563 = vmatpush1.bf16.msra.mxu0 0
        %1564 = vmatprep.mubr.bf16.mxu0 0
        %1565 = vmatmul.mubr.bf16.gmra.mrb[0].mxu0 %v1530
        %v1566 = vpop.f32.mrb[0].mxu0
        %v1567 = vadd.f32 %v1502, %v1566
        %v1568 = vpop.f32.mrb[0].mxu0
        %v1569 = vpop.f32.mrb[0].mxu0
        %v1570 = vpop.f32.mrb[0].mxu0
        %1571 = vdwg.mxu0
        %v1572 = vadd.f32 %v1419, %v1567
        %v1573 = vld [vmem:[%s652] sm:$0x1]
        %v1574 = vld [vmem:[%s655] sm:$0x1]
        %v1575 = vsel %vm689, %v1572, 0.0
        %1576 = vadd.xlane.f32.xlu0 %v1575
        %v1577 = vpop.xlane.xlu0 %1576
        %v1578 = vmul.f32 %v1577, %v1395
        %v1579 = vsub.f32 %v1572, %v1578
        %v1580 = vmul.f32 %v1579, %v1579
        %v1581 = vsel %vm689, %v1580, 0.0
        %1582 = vadd.xlane.f32.xlu0 %v1581
        %v1583 = vpop.xlane.xlu0 %1582
        %v1584 = vmul.f32 %v1583, %v1395
        %v1585 = vadd.f32 %v1584, 1e-05
        %v1586 = vrsqrt.pop %v1585
        %v1587 = vmul.f32 %v1579, %v1586
        %v1589 = vlaneseq
        %v1590 = vshrl.u32 %v1589, 7
        %v1591 = vsub.s32 0, %v1590
        %v1592 = vrot.slane %v1573, %v1591
        %v1594 = vmul.f32 %v1587, %v1592
        %v1596 = vlaneseq
        %v1597 = vshrl.u32 %v1596, 7
        %v1598 = vsub.s32 0, %v1597
        %v1599 = vrot.slane %v1574, %v1598
        %v1601 = vadd.f32 %v1594, %v1599
        %p1602 = scmp.lt.s32.totalorder %s31, 1
        // Predicated region
        $region89: #{mha_block_forward.1} parent=71 // pred_check
          %p1603 = pneg %p1602
        $region90: #{mha_block_forward.1} parent=71 // pred_check_branch
          %1605 = sbr.rel (%p1603) target = $region92
        $region91: #{mha_block_forward.1} parent=71 // pred_region
          %1606 = vst.msk [vmem:[#allocation2] sm:$0xff] %vm689, %v1601
        $region92: #{mha_block_forward.1} parent=71 // pred_fallthru
          _
        %p1607 = scmp.eq.s32.totalorder %s31, 1
        // Predicated region
        $region93: #{mha_block_forward.1} parent=71 // pred_check
          %p1608 = pneg %p1607
        $region94: #{mha_block_forward.1} parent=71 // pred_check_branch
          %1610 = sbr.rel (%p1608) target = $region96
        $region95: #{mha_block_forward.1} parent=71 // pred_region
          %1611 = vst.msk [vmem:[#allocation9] sm:$0xff] %vm689, %v1601
        $region96: #{mha_block_forward.1} parent=71 // pred_fallthru
          _
        // Predicated region
        $region97: #{mha_block_forward.1} parent=71 // pred_check
          %p1612 = pneg %p377
        $region98: #{mha_block_forward.1} parent=71 // pred_check_branch
          %1614 = sbr.rel (%p1612) target = $region100
        $region99: #{mha_block_forward.1} parent=71 // pred_region
          %s1616 = ssub.s32 128, 128
          %1617 = vsyncadd [#allocation5], %s1616
          %s1619 = sshll.u32 [#allocation9], 4
          %s1620 = int_to_ptr.vmem [resolvable:$true] %s1619
          %1622 = dma.vmem_to_hbm [thread:$0]  %s1620, 128, %s13, [#allocation5]
        $region100: #{mha_block_forward.1} parent=71 // pred_fallthru
          _
        // Predicated region
        $region101: #{mha_block_forward.1} parent=71 // pred_check
          %p1623 = pneg %p377
        $region102: #{mha_block_forward.1} parent=71 // pred_check_branch
          %1625 = sbr.rel (%p1623) target = $region104
        $region103: #{mha_block_forward.1} parent=71 // pred_region
          %1626 = dma.done [#allocation5], 128
        $region104: #{mha_block_forward.1} parent=71 // pred_fallthru
          _
      $region72: #{mha_block_forward.1} parent=5 // pred_fallthru
        _
      %p1627 = scmp.le.s32.totalorder 2, %s26
      // Predicated region
      $region105: #{mha_block_forward.1} parent=5 // pred_check
        %p1628 = pneg %p1627
      $region106: #{mha_block_forward.1} parent=5 // pred_check_branch
        %1630 = sbr.rel (%p1628) target = $region108
      $region107: #{mha_block_forward.1} parent=5 // pred_region
        %s1631 = ssub.s32 %s26, 2
      $region108: #{mha_block_forward.1} parent=5 // pred_fallthru
        _
    $region6: #{mha_block_forward.1} parent=1 // loop_footer
      %s30 = sadd.s32 1, %s26
    $region7: #{mha_block_forward.1} parent=1 // loop_footer_branch
      %25 = sbr.rel target = $region3
    $region8: #{mha_block_forward.1} parent=1 // loop_exit
      _
    %1632 = vsyncpa [#allocation4], 1
    %s1633 = scalar_lea.sflag [#allocation4], 1
    %1634 = vsyncpa %s1633, 1
    %1635 = vsyncpa [#allocation7], 1
    %s1636 = scalar_lea.sflag [#allocation7], 1
    %1637 = vsyncpa %s1636, 1
    %1638 = vsyncpa [#allocation5], 1
    %s1639 = scalar_lea.sflag [#allocation5], 1
    %1640 = vsyncpa %s1639, 1

</llo_original>
